<compile_context>
chip_gen: v7x
topology: tpu7x:2x2x1
jax: 0.10.0
libtpu: 0.0.40
codegen_flags: <defaults>
</compile_context>

<pallas_src>
import functools

import jax
import jax.numpy as jnp
from jax.experimental import pallas as pl
from jax.experimental.pallas import tpu as pltpu

_EPS = 1e-5  # nn.BatchNorm1d default eps


def _bn_relu(x, gamma, beta):
    # BatchNorm1d, training-mode forward: biased batch statistics (per feature).
    mu = jnp.mean(x, axis=0, keepdims=True)
    var = jnp.mean((x - mu) ** 2, axis=0, keepdims=True)
    y = (x - mu) * jax.lax.rsqrt(var + _EPS) * gamma + beta
    return jnp.maximum(y, 0.0)


def _masked_log_softmax(x, mask):
    # log-softmax over the lanes selected by `mask`; 0 elsewhere.
    xm = jnp.where(mask, x, -1e30)
    m = jnp.max(xm, axis=1, keepdims=True)
    lse = jnp.log(jnp.sum(jnp.exp(xm - m), axis=1, keepdims=True))
    return jnp.where(mask, x - m - lse, 0.0)


def _barlow_dann_kernel(
    src_ref,    # (B, d_in)             bf16
    wf_ref,     # (d_in, in_features)   bf16  synthetic feature projection
    w1_ref,     # (in_features, 2*Hp)   bf16  fused [d_fc1 | c_fc1], zero-padded
    wc2_ref,    # (Hp, Hp)              bf16  c_fc2, zero-padded to 128x128
    wc3_ref,    # (Hp, slab_w)          bf16  c_fc3, placed at lanes [0:nc]
    wd2_ref,    # (Hp, slab_w)          bf16  d_fc2, placed at lanes [nc:nc+2]
    bias_ref,   # (9, W)                f32   all biases / BN gamma / beta (1 DMA)
    out_ref,    # (B, slab_w)           f32   [cls | dl | loss | 0] lane-dense slab
    *, lambd, scale_factor, hidden, hidden_pad, in_features, n_classes,
):
    bf16 = jnp.bfloat16
    hp = hidden_pad
    slab_w = out_ref.shape[1]

    # --- unpack the packed bias/BN slab (one DMA instead of nine) ----------
    bf_b = bias_ref[0:1, :in_features]
    b1 = bias_ref[1:2, :2 * hp]
    g1 = bias_ref[2:3, :2 * hp]
    be1 = bias_ref[3:4, :2 * hp]
    bc2 = bias_ref[4:5, :hp]
    g2 = bias_ref[5:6, :hp]
    be2 = bias_ref[6:7, :hp]
    bc3_row = bias_ref[7:8, :slab_w]
    bd2_row = bias_ref[8:9, :slab_w]

    # ---- feature extractor (synthetic linear stand-in for the ViT) --------
    # bf16 operands, f32 accumulation on the MXU.
    src_feat = jnp.dot(src_ref[...], wf_ref[...],
                       preferred_element_type=jnp.float32) + bf_b

    # ---- fused first hidden layer: lanes [0:Hp]=domain, [Hp:2Hp]=class ----
    # BatchNorm is per-feature so fusing both branches' BN is exact; the
    # zero-padded lanes stay exactly 0 after BN/ReLU (0 * rsqrt(eps) = 0).
    h_all = jnp.dot(src_feat.astype(bf16), w1_ref[...],
                    preferred_element_type=jnp.float32) + b1
    h_all = _bn_relu(h_all, g1, be1)

    d = h_all[:, :hp]        # domain branch  (128-lane aligned slice)
    hc = h_all[:, hp:]       # class branch   (128-lane aligned slice)

    # ---------------------- class classifier tail --------------------------
    # TODO(synk): nn.Dropout() is stochastic; modeled as identity (eval mode).
    h = jnp.dot(hc.astype(bf16), wc2_ref[...],
                preferred_element_type=jnp.float32) + bc2
    h = _bn_relu(h, g2, be2)
    logits_c = jnp.dot(h.astype(bf16), wc3_ref[...],
                       preferred_element_type=jnp.float32) + bc3_row  # (B, slab_w)

    # ---------------------- domain softmax head ----------------------------
    # The reference feeds src_feature to the domain classifier for BOTH the
    # src and tgt domain outputs, so one copy suffices (returned twice).
    logits_d = jnp.dot(d.astype(bf16), wd2_ref[...],
                       preferred_element_type=jnp.float32) + bd2_row  # (B, slab_w)

    lane_o = jax.lax.broadcasted_iota(jnp.int32, (1, slab_w), 1)
    mask_cls = lane_o < n_classes
    mask_dom = jnp.logical_and(lane_o >= n_classes, lane_o < n_classes + 2)
    mask_loss = lane_o == n_classes + 2

    cls_slab = _masked_log_softmax(logits_c, mask_cls)   # lanes [0, nc)
    dl_slab = _masked_log_softmax(logits_d, mask_dom)    # lanes [nc, nc+2)

    # ------------------------ Barlow loss -----------------------------------
    # c = d.T @ d / B.  Work with the tiny BxB Gram matrix instead of HxH:
    #   c_jj      = sum_b d[b,j]^2 / B
    #   ||c||_F^2 = ||d @ d.T||_F^2 / B^2
    #   off_diag  = ||c||_F^2 - sum_j c_jj^2
    # Padded lanes of d are exactly 0, so they only affect on_diag ((0-1)^2),
    # which is masked to the real `hidden` lanes below.
    b = src_ref.shape[0]
    inv_b = 1.0 / b
    diag = jnp.sum(d * d, axis=0, keepdims=True) * inv_b              # (1, Hp)
    lane_h = jax.lax.broadcasted_iota(jnp.int32, (1, hp), 1)
    on_diag = jnp.sum(jnp.where(lane_h < hidden, (diag - 1.0) ** 2, 0.0),
                      axis=1, keepdims=True)                          # (1, 1)
    gram = jax.lax.dot_general(d, d, (((1,), (1,)), ((), ())),
                               preferred_element_type=jnp.float32)    # (B, B)
    fro2 = jnp.sum(gram * gram, keepdims=True) * (inv_b * inv_b)      # (1, 1)
    off_diag = fro2 - jnp.sum(diag * diag, keepdims=True)
    loss = scale_factor * (on_diag + lambd * off_diag)                # (1, 1)
    loss_slab = jnp.where(mask_loss,
                          jnp.broadcast_to(loss, (b, slab_w)), 0.0)

    # ---- single full-width, unmasked store of the lane-dense output slab --
    out_ref[...] = cls_slab + dl_slab + loss_slab


def init_params(key, d_in, in_features, n_classes, hidden=100):
    """Deterministic PyTorch-style (uniform +/- 1/sqrt(fan_in)) init."""
    ks = jax.random.split(key, 6)

    def linear(k, fan_in, fan_out):
        lim = 1.0 / (fan_in ** 0.5)
        kw, kb = jax.random.split(k)
        w = jax.random.uniform(kw, (fan_in, fan_out), jnp.float32, -lim, lim)
        b = jax.random.uniform(kb, (1, fan_out), jnp.float32, -lim, lim)
        return w, b

    wf, bf = linear(ks[0], d_in, in_features)                 # synthetic feature proj
    wc1, bc1 = linear(ks[1], in_features, hidden)             # c_fc1
    g1, be1 = jnp.ones((1, hidden)), jnp.zeros((1, hidden))   # c_bn1
    wc2, bc2 = linear(ks[2], hidden, hidden)                  # c_fc2
    g2, be2 = jnp.ones((1, hidden)), jnp.zeros((1, hidden))   # c_bn2
    wc3, bc3 = linear(ks[3], hidden, n_classes)               # c_fc3
    wd1, bd1 = linear(ks[4], in_features, hidden)             # d_fc1
    gd, bed = jnp.ones((1, hidden)), jnp.zeros((1, hidden))   # d_bn1
    wd2, bd2 = linear(ks[5], hidden, 2)                       # d_fc2
    return [wf, bf, wc1, bc1, g1, be1, wc2, bc2, g2, be2, wc3, bc3,
            wd1, bd1, gd, bed, wd2, bd2]


def prepare_params(params, *, hidden_pad=128):
    """One-time fuse / zero-pad / bf16-cast of the module parameters.

    Hoisted out of the hot path so the per-step forward launches the Pallas
    kernel directly (no per-call XLA concat/cast traffic).
    """
    (wf, bf, wc1, bc1, g1, be1, wc2, bc2, g2, be2, wc3, bc3,
     wd1, bd1, gd, bed, wd2, bd2) = params
    in_features = wf.shape[1]
    hidden = wc1.shape[1]
    n_classes = wc3.shape[1]
    hp = hidden_pad
    assert hp % 128 == 0 and hp >= hidden
    slab_w = ((n_classes + 3 + 127) // 128) * 128

    f32 = jnp.float32
    bf16 = jnp.bfloat16

    # Fused first layer [d_fc1 | c_fc1], each branch zero-padded to hp lanes.
    w1 = (jnp.zeros((in_features, 2 * hp), f32)
          .at[:, :hidden].set(wd1).at[:, hp:hp + hidden].set(wc1))
    b1 = (jnp.zeros((1, 2 * hp), f32)
          .at[:, :hidden].set(bd1).at[:, hp:hp + hidden].set(bc1))
    g1f = (jnp.ones((1, 2 * hp), f32)
           .at[:, :hidden].set(gd).at[:, hp:hp + hidden].set(g1))
    be1f = (jnp.zeros((1, 2 * hp), f32)
            .at[:, :hidden].set(bed).at[:, hp:hp + hidden].set(be1))

    # c_fc2 / c_bn2 zero-padded to 128-lane multiples.
    wc2p = jnp.zeros((hp, hp), f32).at[:hidden, :hidden].set(wc2)
    bc2p = jnp.zeros((1, hp), f32).at[:, :hidden].set(bc2)
    g2p = jnp.ones((1, hp), f32).at[:, :hidden].set(g2)
    be2p = jnp.zeros((1, hp), f32).at[:, :hidden].set(be2)

    # Heads pre-placed into lane-dense output slabs (cls at [0:nc],
    # domain at [nc:nc+2]) so the kernel writes one full-width store.
    wc3s = jnp.zeros((hp, slab_w), f32).at[:hidden, :n_classes].set(wc3)
    wd2s = jnp.zeros((hp, slab_w), f32).at[:hidden, n_classes:n_classes + 2].set(wd2)

    # Pack every tiny (1, *) bias / gamma / beta vector into ONE f32 slab.
    W = ((max(in_features, 2 * hp, slab_w) + 127) // 128) * 128

    def row(v, col0=0, base=0.0):
        r = jnp.full((1, W), base, f32)
        return r.at[:, col0:col0 + v.shape[1]].set(v)

    bias_slab = jnp.concatenate(
        [row(bf), row(b1), row(g1f, base=0.0), row(be1f),
         row(bc2p), row(g2p), row(be2p),
         row(bc3), row(bd2, col0=n_classes)], axis=0)       # (9, W)

    return dict(
        wf=wf.astype(bf16), w1=w1.astype(bf16), wc2=wc2p.astype(bf16),
        wc3=wc3s.astype(bf16), wd2=wd2s.astype(bf16), bias=bias_slab,
        hidden=hidden, hidden_pad=hp, in_features=in_features,
        n_classes=n_classes, slab_w=slab_w)


def barlow_dann_forward(input_data, prepared, alpha=1.0, *, lambd=0.005,
                        scale_factor=1.0):
    # `alpha` is accepted for API parity with the PyTorch forward but is
    # unused there as well (no gradient-reversal applied in forward()).
    del alpha
    B = input_data.shape[0]
    hidden = prepared["hidden"]
    hp = prepared["hidden_pad"]
    in_features = prepared["in_features"]
    nc = prepared["n_classes"]
    slab_w = prepared["slab_w"]

    # Only the src view feeds any output with the default flags
    # (use_barlow=True, use_coral=False, use_mmd=False) -> drop tgt entirely.
    src = input_data[..., 0].reshape(B, -1).astype(jnp.bfloat16)
    d_in = src.shape[1]

    args = (src, prepared["wf"], prepared["w1"], prepared["wc2"],
            prepared["wc3"], prepared["wd2"], prepared["bias"])

    flops = 2 * B * (d_in * in_features + in_features * 2 * hp + hp * hp
                     + hp * slab_w * 2 + hp * B)
    bytes_accessed = sum(int(a.size) * a.dtype.itemsize for a in args) \
        + B * slab_w * 4
    cost = pl.CostEstimate(flops=int(flops),
                           transcendentals=int(2 * B * slab_w + 3 * hp),
                           bytes_accessed=int(bytes_accessed))

    kernel = functools.partial(
        _barlow_dann_kernel, lambd=float(lambd),
        scale_factor=float(scale_factor), hidden=hidden, hidden_pad=hp,
        in_features=in_features, n_classes=nc)

    # Single invocation (no grid); all operands are tiny and live fully in
    # VMEM (well under the explicit 16 MiB scoped limit, safe on v5e too).
    slab = pl.pallas_call(
        kernel,
        out_shape=jax.ShapeDtypeStruct((B, slab_w), jnp.float32),
        compiler_params=pltpu.CompilerParams(
            vmem_limit_bytes=16 * 1024 * 1024),
        cost_estimate=cost,
    )(*args)

    loss = slab[0:1, nc + 2:nc + 3]                 # (1, 1)
    cls = slab[:, :nc]                              # (B, n_classes)
    dl = slab[:, nc:nc + 2]                         # (B, 2)
    # src/tgt domain logits are identical in the reference (both computed
    # from src_feature): written once by the kernel, returned twice here.
    return loss, cls, dl, dl


def _reference(x, params, lambd, scale_factor):
    """Pure-JAX reference mirroring the kernel semantics (incl. bf16 matmuls)."""
    (wf, bf, wc1, bc1, g1, be1, wc2, bc2, g2, be2, wc3, bc3,
     wd1, bd1, gd, bed, wd2, bd2) = params
    B = x.shape[0]
    bf16 = jnp.bfloat16

    def mm(a, w):
        return jnp.dot(a.astype(bf16), w.astype(bf16),
                       preferred_element_type=jnp.float32)

    def bn_relu(h, g, b):
        mu = h.mean(0, keepdims=True)
        var = ((h - mu) ** 2).mean(0, keepdims=True)
        return jnp.maximum((h - mu) / jnp.sqrt(var + _EPS) * g + b, 0.0)

    src = x[..., 0].reshape(B, -1)
    src_feat = mm(src, wf) + bf

    h = bn_relu(mm(src_feat, wc1) + bc1, g1, be1)
    h = bn_relu(mm(h, wc2) + bc2, g2, be2)
    cls = jax.nn.log_softmax(mm(h, wc3) + bc3, axis=1)

    d = bn_relu(mm(src_feat, wd1) + bd1, gd, bed)
    dl = jax.nn.log_softmax(mm(d, wd2) + bd2, axis=1)

    c = d.T @ d / B
    on = jnp.sum((jnp.diag(c) - 1.0) ** 2)
    off = jnp.sum(c ** 2) - jnp.sum(jnp.diag(c) ** 2)
    loss = scale_factor * (on + lambd * off)
    return loss, cls, dl, dl


if __name__ == "__main__":
    key = jax.random.PRNGKey(0)
    B, C, H, W = 2, 4, 16, 16
    in_features, n_classes = 256, 10
    lambd, scale_factor = 0.005, 1.0

    k_in, k_par = jax.random.split(key)
    x = jax.random.normal(k_in, (B, C, H, W, 2), jnp.float32)
    params = init_params(k_par, C * H * W, in_features, n_classes)

    # One-time parameter preparation (fuse / pad / bf16 cast), outside the
    # hot path.
    prepared = prepare_params(params)

    outs = barlow_dann_forward(x, prepared, alpha=1.0, lambd=lambd,
                               scale_factor=scale_factor)
    outs = jax.block_until_ready(outs)

    ref = _reference(x, params, lambd, scale_factor)
    for o, r in zip(outs, ref):
        r = jnp.asarray(r).reshape(o.shape)
        assert jnp.allclose(o, r, atol=2e-3, rtol=2e-3), (o, r)

    print("KERNEL_OK")
</pallas_src>

<mosaic_0001>
module attributes {stable_mosaic.version = 11 : i64} {
  func.func @_barlow_dann_kernel(%arg0: memref<2x1024xbf16, #tpu.memory_space<vmem>>, %arg1: memref<1024x256xbf16, #tpu.memory_space<vmem>>, %arg2: memref<256x256xbf16, #tpu.memory_space<vmem>>, %arg3: memref<128x128xbf16, #tpu.memory_space<vmem>>, %arg4: memref<128x128xbf16, #tpu.memory_space<vmem>>, %arg5: memref<128x128xbf16, #tpu.memory_space<vmem>>, %arg6: memref<9x256xf32, #tpu.memory_space<vmem>>, %arg7: memref<2x128xf32, #tpu.memory_space<vmem>>) attributes {dimension_semantics = [], scalar_prefetch = 0 : i64, scratch_operands = 0 : i64, tpu.core_type = #tpu.core_type<tc>} {
    %c0 = arith.constant 0 : index
    %c0_0 = arith.constant 0 : index
    %0 = vector.load %arg6[%c0, %c0_0] : memref<9x256xf32, #tpu.memory_space<vmem>>, vector<1x256xf32>
    %c1 = arith.constant 1 : index
    %c0_1 = arith.constant 0 : index
    %1 = vector.load %arg6[%c1, %c0_1] : memref<9x256xf32, #tpu.memory_space<vmem>>, vector<1x256xf32>
    %c2 = arith.constant 2 : index
    %c0_2 = arith.constant 0 : index
    %2 = vector.load %arg6[%c2, %c0_2] : memref<9x256xf32, #tpu.memory_space<vmem>>, vector<1x256xf32>
    %c3 = arith.constant 3 : index
    %c0_3 = arith.constant 0 : index
    %3 = vector.load %arg6[%c3, %c0_3] : memref<9x256xf32, #tpu.memory_space<vmem>>, vector<1x256xf32>
    %c4 = arith.constant 4 : index
    %c0_4 = arith.constant 0 : index
    %4 = vector.load %arg6[%c4, %c0_4] : memref<9x256xf32, #tpu.memory_space<vmem>>, vector<1x128xf32>
    %c5 = arith.constant 5 : index
    %c0_5 = arith.constant 0 : index
    %5 = vector.load %arg6[%c5, %c0_5] : memref<9x256xf32, #tpu.memory_space<vmem>>, vector<1x128xf32>
    %c6 = arith.constant 6 : index
    %c0_6 = arith.constant 0 : index
    %6 = vector.load %arg6[%c6, %c0_6] : memref<9x256xf32, #tpu.memory_space<vmem>>, vector<1x128xf32>
    %c7 = arith.constant 7 : index
    %c0_7 = arith.constant 0 : index
    %7 = vector.load %arg6[%c7, %c0_7] : memref<9x256xf32, #tpu.memory_space<vmem>>, vector<1x128xf32>
    %c8 = arith.constant 8 : index
    %c0_8 = arith.constant 0 : index
    %8 = vector.load %arg6[%c8, %c0_8] : memref<9x256xf32, #tpu.memory_space<vmem>>, vector<1x128xf32>
    %c0_9 = arith.constant 0 : index
    %c0_10 = arith.constant 0 : index
    %9 = vector.load %arg0[%c0_9, %c0_10] : memref<2x1024xbf16, #tpu.memory_space<vmem>>, vector<2x1024xbf16>
    %c0_11 = arith.constant 0 : index
    %c0_12 = arith.constant 0 : index
    %10 = vector.load %arg1[%c0_11, %c0_12] : memref<1024x256xbf16, #tpu.memory_space<vmem>>, vector<1024x256xbf16>
    %cst = arith.constant dense<0.000000e+00> : vector<2x256xf32>
    %11 = tpu.matmul %9, %10, %cst {dimension_numbers = #tpu.dot_dimension_numbers<[1], [0], [0], [1], [0, 0, 1, 1], [], []>} : vector<2x1024xbf16>, vector<1024x256xbf16>, vector<2x256xf32> -> vector<2x256xf32>
    %12 = vector.broadcast %0 : vector<1x256xf32> to vector<2x256xf32>
    %13 = arith.addf %11, %12 : vector<2x256xf32>
    %14 = arith.truncf %13 : vector<2x256xf32> to vector<2x256xbf16>
    %c0_13 = arith.constant 0 : index
    %c0_14 = arith.constant 0 : index
    %15 = vector.load %arg2[%c0_13, %c0_14] : memref<256x256xbf16, #tpu.memory_space<vmem>>, vector<256x256xbf16>
    %cst_15 = arith.constant dense<0.000000e+00> : vector<2x256xf32>
    %16 = tpu.matmul %14, %15, %cst_15 {dimension_numbers = #tpu.dot_dimension_numbers<[1], [0], [0], [1], [0, 0, 1, 1], [], []>} : vector<2x256xbf16>, vector<256x256xbf16>, vector<2x256xf32> -> vector<2x256xf32>
    %17 = vector.broadcast %1 : vector<1x256xf32> to vector<2x256xf32>
    %18 = arith.addf %16, %17 : vector<2x256xf32>
    %cst_16 = arith.constant dense<0.000000e+00> : vector<256xf32>
    %19 = vector.multi_reduction <add>, %18, %cst_16 [0] : vector<2x256xf32> to vector<256xf32>
    %20 = vector.shape_cast %19 : vector<256xf32> to vector<1x256xf32>
    %cst_17 = arith.constant 2.000000e+00 : f32
    %21 = vector.broadcast %cst_17 : f32 to vector<1x256xf32>
    %22 = arith.divf %20, %21 : vector<1x256xf32>
    %23 = vector.broadcast %22 : vector<1x256xf32> to vector<2x256xf32>
    %24 = arith.subf %18, %23 : vector<2x256xf32>
    %25 = arith.mulf %24, %24 : vector<2x256xf32>
    %cst_18 = arith.constant dense<0.000000e+00> : vector<256xf32>
    %26 = vector.multi_reduction <add>, %25, %cst_18 [0] : vector<2x256xf32> to vector<256xf32>
    %27 = vector.shape_cast %26 : vector<256xf32> to vector<1x256xf32>
    %cst_19 = arith.constant 2.000000e+00 : f32
    %28 = vector.broadcast %cst_19 : f32 to vector<1x256xf32>
    %29 = arith.divf %27, %28 : vector<1x256xf32>
    %30 = vector.broadcast %22 : vector<1x256xf32> to vector<2x256xf32>
    %31 = arith.subf %18, %30 : vector<2x256xf32>
    %cst_20 = arith.constant 9.99999974E-6 : f32
    %32 = vector.broadcast %cst_20 : f32 to vector<1x256xf32>
    %33 = arith.addf %29, %32 : vector<1x256xf32>
    %34 = math.rsqrt %33 : vector<1x256xf32>
    %35 = vector.broadcast %34 : vector<1x256xf32> to vector<2x256xf32>
    %36 = arith.mulf %31, %35 : vector<2x256xf32>
    %37 = vector.broadcast %2 : vector<1x256xf32> to vector<2x256xf32>
    %38 = arith.mulf %36, %37 : vector<2x256xf32>
    %39 = vector.broadcast %3 : vector<1x256xf32> to vector<2x256xf32>
    %40 = arith.addf %38, %39 : vector<2x256xf32>
    %cst_21 = arith.constant 0.000000e+00 : f32
    %41 = vector.broadcast %cst_21 : f32 to vector<2x256xf32>
    %42 = arith.maximumf %40, %41 : vector<2x256xf32>
    %43 = vector.extract_strided_slice %42 {offsets = [0, 0], sizes = [2, 128], strides = [1, 1]} : vector<2x256xf32> to vector<2x128xf32>
    %44 = vector.extract_strided_slice %42 {offsets = [0, 128], sizes = [2, 128], strides = [1, 1]} : vector<2x256xf32> to vector<2x128xf32>
    %45 = arith.truncf %44 : vector<2x128xf32> to vector<2x128xbf16>
    %c0_22 = arith.constant 0 : index
    %c0_23 = arith.constant 0 : index
    %46 = vector.load %arg3[%c0_22, %c0_23] : memref<128x128xbf16, #tpu.memory_space<vmem>>, vector<128x128xbf16>
    %cst_24 = arith.constant dense<0.000000e+00> : vector<2x128xf32>
    %47 = tpu.matmul %45, %46, %cst_24 {dimension_numbers = #tpu.dot_dimension_numbers<[1], [0], [0], [1], [0, 0, 1, 1], [], []>} : vector<2x128xbf16>, vector<128x128xbf16>, vector<2x128xf32> -> vector<2x128xf32>
    %48 = vector.broadcast %4 : vector<1x128xf32> to vector<2x128xf32>
    %49 = arith.addf %47, %48 : vector<2x128xf32>
    %cst_25 = arith.constant dense<0.000000e+00> : vector<128xf32>
    %50 = vector.multi_reduction <add>, %49, %cst_25 [0] : vector<2x128xf32> to vector<128xf32>
    %51 = vector.shape_cast %50 : vector<128xf32> to vector<1x128xf32>
    %cst_26 = arith.constant 2.000000e+00 : f32
    %52 = vector.broadcast %cst_26 : f32 to vector<1x128xf32>
    %53 = arith.divf %51, %52 : vector<1x128xf32>
    %54 = vector.broadcast %53 : vector<1x128xf32> to vector<2x128xf32>
    %55 = arith.subf %49, %54 : vector<2x128xf32>
    %56 = arith.mulf %55, %55 : vector<2x128xf32>
    %cst_27 = arith.constant dense<0.000000e+00> : vector<128xf32>
    %57 = vector.multi_reduction <add>, %56, %cst_27 [0] : vector<2x128xf32> to vector<128xf32>
    %58 = vector.shape_cast %57 : vector<128xf32> to vector<1x128xf32>
    %cst_28 = arith.constant 2.000000e+00 : f32
    %59 = vector.broadcast %cst_28 : f32 to vector<1x128xf32>
    %60 = arith.divf %58, %59 : vector<1x128xf32>
    %61 = vector.broadcast %53 : vector<1x128xf32> to vector<2x128xf32>
    %62 = arith.subf %49, %61 : vector<2x128xf32>
    %cst_29 = arith.constant 9.99999974E-6 : f32
    %63 = vector.broadcast %cst_29 : f32 to vector<1x128xf32>
    %64 = arith.addf %60, %63 : vector<1x128xf32>
    %65 = math.rsqrt %64 : vector<1x128xf32>
    %66 = vector.broadcast %65 : vector<1x128xf32> to vector<2x128xf32>
    %67 = arith.mulf %62, %66 : vector<2x128xf32>
    %68 = vector.broadcast %5 : vector<1x128xf32> to vector<2x128xf32>
    %69 = arith.mulf %67, %68 : vector<2x128xf32>
    %70 = vector.broadcast %6 : vector<1x128xf32> to vector<2x128xf32>
    %71 = arith.addf %69, %70 : vector<2x128xf32>
    %cst_30 = arith.constant 0.000000e+00 : f32
    %72 = vector.broadcast %cst_30 : f32 to vector<2x128xf32>
    %73 = arith.maximumf %71, %72 : vector<2x128xf32>
    %74 = arith.truncf %73 : vector<2x128xf32> to vector<2x128xbf16>
    %c0_31 = arith.constant 0 : index
    %c0_32 = arith.constant 0 : index
    %75 = vector.load %arg4[%c0_31, %c0_32] : memref<128x128xbf16, #tpu.memory_space<vmem>>, vector<128x128xbf16>
    %cst_33 = arith.constant dense<0.000000e+00> : vector<2x128xf32>
    %76 = tpu.matmul %74, %75, %cst_33 {dimension_numbers = #tpu.dot_dimension_numbers<[1], [0], [0], [1], [0, 0, 1, 1], [], []>} : vector<2x128xbf16>, vector<128x128xbf16>, vector<2x128xf32> -> vector<2x128xf32>
    %77 = vector.broadcast %7 : vector<1x128xf32> to vector<2x128xf32>
    %78 = arith.addf %76, %77 : vector<2x128xf32>
    %79 = arith.truncf %43 : vector<2x128xf32> to vector<2x128xbf16>
    %c0_34 = arith.constant 0 : index
    %c0_35 = arith.constant 0 : index
    %80 = vector.load %arg5[%c0_34, %c0_35] : memref<128x128xbf16, #tpu.memory_space<vmem>>, vector<128x128xbf16>
    %cst_36 = arith.constant dense<0.000000e+00> : vector<2x128xf32>
    %81 = tpu.matmul %79, %80, %cst_36 {dimension_numbers = #tpu.dot_dimension_numbers<[1], [0], [0], [1], [0, 0, 1, 1], [], []>} : vector<2x128xbf16>, vector<128x128xbf16>, vector<2x128xf32> -> vector<2x128xf32>
    %82 = vector.broadcast %8 : vector<1x128xf32> to vector<2x128xf32>
    %83 = arith.addf %81, %82 : vector<2x128xf32>
    %84 = tpu.iota {dimensions = array<i32: 1>} : vector<1x128xi32>
    %c10_i32 = arith.constant 10 : i32
    %85 = vector.broadcast %c10_i32 : i32 to vector<1x128xi32>
    %86 = arith.cmpi slt, %84, %85 : vector<1x128xi32>
    %c10_i32_37 = arith.constant 10 : i32
    %87 = vector.broadcast %c10_i32_37 : i32 to vector<1x128xi32>
    %88 = arith.cmpi sge, %84, %87 : vector<1x128xi32>
    %c12_i32 = arith.constant 12 : i32
    %89 = vector.broadcast %c12_i32 : i32 to vector<1x128xi32>
    %90 = arith.cmpi slt, %84, %89 : vector<1x128xi32>
    %91 = arith.andi %88, %90 : vector<1x128xi1>
    %c12_i32_38 = arith.constant 12 : i32
    %92 = vector.broadcast %c12_i32_38 : i32 to vector<1x128xi32>
    %93 = arith.cmpi eq, %84, %92 : vector<1x128xi32>
    %cst_39 = arith.constant -1.000000e+30 : f32
    %94 = vector.shape_cast %86 : vector<1x128xi1> to vector<1x128xi1>
    %95 = vector.broadcast %94 : vector<1x128xi1> to vector<2x128xi1>
    %96 = vector.broadcast %cst_39 : f32 to vector<2x128xf32>
    %97 = arith.select %95, %78, %96 : vector<2x128xi1>, vector<2x128xf32>
    %cst_40 = arith.constant dense<0xFF800000> : vector<2xf32>
    %98 = vector.multi_reduction <maximumf>, %97, %cst_40 [1] : vector<2x128xf32> to vector<2xf32>
    %99 = vector.shape_cast %98 : vector<2xf32> to vector<2x1xf32>
    %100 = vector.broadcast %99 : vector<2x1xf32> to vector<2x128xf32>
    %101 = arith.subf %97, %100 : vector<2x128xf32>
    %102 = math.exp %101 : vector<2x128xf32>
    %cst_41 = arith.constant dense<0.000000e+00> : vector<2xf32>
    %103 = vector.multi_reduction <add>, %102, %cst_41 [1] : vector<2x128xf32> to vector<2xf32>
    %104 = vector.shape_cast %103 : vector<2xf32> to vector<2x1xf32>
    %105 = math.log %104 : vector<2x1xf32>
    %106 = vector.broadcast %99 : vector<2x1xf32> to vector<2x128xf32>
    %107 = arith.subf %78, %106 : vector<2x128xf32>
    %108 = vector.broadcast %105 : vector<2x1xf32> to vector<2x128xf32>
    %109 = arith.subf %107, %108 : vector<2x128xf32>
    %cst_42 = arith.constant 0.000000e+00 : f32
    %110 = vector.shape_cast %86 : vector<1x128xi1> to vector<1x128xi1>
    %111 = vector.broadcast %110 : vector<1x128xi1> to vector<2x128xi1>
    %112 = vector.broadcast %cst_42 : f32 to vector<2x128xf32>
    %113 = arith.select %111, %109, %112 : vector<2x128xi1>, vector<2x128xf32>
    %cst_43 = arith.constant -1.000000e+30 : f32
    %114 = vector.shape_cast %91 : vector<1x128xi1> to vector<1x128xi1>
    %115 = vector.broadcast %114 : vector<1x128xi1> to vector<2x128xi1>
    %116 = vector.broadcast %cst_43 : f32 to vector<2x128xf32>
    %117 = arith.select %115, %83, %116 : vector<2x128xi1>, vector<2x128xf32>
    %cst_44 = arith.constant dense<0xFF800000> : vector<2xf32>
    %118 = vector.multi_reduction <maximumf>, %117, %cst_44 [1] : vector<2x128xf32> to vector<2xf32>
    %119 = vector.shape_cast %118 : vector<2xf32> to vector<2x1xf32>
    %120 = vector.broadcast %119 : vector<2x1xf32> to vector<2x128xf32>
    %121 = arith.subf %117, %120 : vector<2x128xf32>
    %122 = math.exp %121 : vector<2x128xf32>
    %cst_45 = arith.constant dense<0.000000e+00> : vector<2xf32>
    %123 = vector.multi_reduction <add>, %122, %cst_45 [1] : vector<2x128xf32> to vector<2xf32>
    %124 = vector.shape_cast %123 : vector<2xf32> to vector<2x1xf32>
    %125 = math.log %124 : vector<2x1xf32>
    %126 = vector.broadcast %119 : vector<2x1xf32> to vector<2x128xf32>
    %127 = arith.subf %83, %126 : vector<2x128xf32>
    %128 = vector.broadcast %125 : vector<2x1xf32> to vector<2x128xf32>
    %129 = arith.subf %127, %128 : vector<2x128xf32>
    %cst_46 = arith.constant 0.000000e+00 : f32
    %130 = vector.shape_cast %91 : vector<1x128xi1> to vector<1x128xi1>
    %131 = vector.broadcast %130 : vector<1x128xi1> to vector<2x128xi1>
    %132 = vector.broadcast %cst_46 : f32 to vector<2x128xf32>
    %133 = arith.select %131, %129, %132 : vector<2x128xi1>, vector<2x128xf32>
    %134 = arith.mulf %43, %43 : vector<2x128xf32>
    %cst_47 = arith.constant dense<0.000000e+00> : vector<128xf32>
    %135 = vector.multi_reduction <add>, %134, %cst_47 [0] : vector<2x128xf32> to vector<128xf32>
    %136 = vector.shape_cast %135 : vector<128xf32> to vector<1x128xf32>
    %cst_48 = arith.constant 5.000000e-01 : f32
    %137 = vector.broadcast %cst_48 : f32 to vector<1x128xf32>
    %138 = arith.mulf %136, %137 : vector<1x128xf32>
    %139 = tpu.iota {dimensions = array<i32: 1>} : vector<1x128xi32>
    %c100_i32 = arith.constant 100 : i32
    %140 = vector.broadcast %c100_i32 : i32 to vector<1x128xi32>
    %141 = arith.cmpi slt, %139, %140 : vector<1x128xi32>
    %cst_49 = arith.constant 1.000000e+00 : f32
    %142 = vector.broadcast %cst_49 : f32 to vector<1x128xf32>
    %143 = arith.subf %138, %142 : vector<1x128xf32>
    %144 = arith.mulf %143, %143 : vector<1x128xf32>
    %cst_50 = arith.constant 0.000000e+00 : f32
    %145 = vector.broadcast %cst_50 : f32 to vector<1x128xf32>
    %146 = arith.select %141, %144, %145 : vector<1x128xi1>, vector<1x128xf32>
    %cst_51 = arith.constant dense<0.000000e+00> : vector<1xf32>
    %147 = vector.multi_reduction <add>, %146, %cst_51 [1] : vector<1x128xf32> to vector<1xf32>
    %148 = vector.shape_cast %147 : vector<1xf32> to vector<1x1xf32>
    %cst_52 = arith.constant dense<0.000000e+00> : vector<2x2xf32>
    %149 = tpu.matmul %43, %43, %cst_52 {dimension_numbers = #tpu.dot_dimension_numbers<[1], [1], [0], [0], [0, 0, 1, 0], [], []>} : vector<2x128xf32>, vector<2x128xf32>, vector<2x2xf32> -> vector<2x2xf32>
    %150 = arith.mulf %149, %149 : vector<2x2xf32>
    %151 = vector.shape_cast %150 : vector<2x2xf32> to vector<1x2x2xf32>
    %cst_53 = arith.constant dense<0.000000e+00> : vector<1xf32>
    %152 = vector.multi_reduction <add>, %151, %cst_53 [1, 2] : vector<1x2x2xf32> to vector<1xf32>
    %153 = vector.shape_cast %152 : vector<1xf32> to vector<1x1x1xf32>
    %154 = vector.extract %153[0, 0, 0] : f32 from vector<1x1x1xf32>
    %155 = vector.broadcast %154 : f32 to vector<1x1xf32>
    %cst_54 = arith.constant 2.500000e-01 : f32
    %156 = vector.broadcast %cst_54 : f32 to vector<1x1xf32>
    %157 = arith.mulf %155, %156 : vector<1x1xf32>
    %158 = arith.mulf %138, %138 : vector<1x128xf32>
    %159 = vector.shape_cast %158 : vector<1x128xf32> to vector<1x1x128xf32>
    %cst_55 = arith.constant dense<0.000000e+00> : vector<1xf32>
    %160 = vector.multi_reduction <add>, %159, %cst_55 [1, 2] : vector<1x1x128xf32> to vector<1xf32>
    %161 = vector.shape_cast %160 : vector<1xf32> to vector<1x1x1xf32>
    %162 = vector.extract %161[0, 0, 0] : f32 from vector<1x1x1xf32>
    %163 = vector.broadcast %162 : f32 to vector<1x1xf32>
    %164 = arith.subf %157, %163 : vector<1x1xf32>
    %cst_56 = arith.constant 5.000000e-03 : f32
    %165 = vector.broadcast %cst_56 : f32 to vector<1x1xf32>
    %166 = arith.mulf %165, %164 : vector<1x1xf32>
    %167 = arith.addf %148, %166 : vector<1x1xf32>
    %cst_57 = arith.constant 1.000000e+00 : f32
    %168 = vector.broadcast %cst_57 : f32 to vector<1x1xf32>
    %169 = arith.mulf %168, %167 : vector<1x1xf32>
    %170 = vector.shape_cast %169 : vector<1x1xf32> to vector<1x1xf32>
    %171 = vector.broadcast %170 : vector<1x1xf32> to vector<2x128xf32>
    %cst_58 = arith.constant 0.000000e+00 : f32
    %172 = vector.shape_cast %93 : vector<1x128xi1> to vector<1x128xi1>
    %173 = vector.broadcast %172 : vector<1x128xi1> to vector<2x128xi1>
    %174 = vector.broadcast %cst_58 : f32 to vector<2x128xf32>
    %175 = arith.select %173, %171, %174 : vector<2x128xi1>, vector<2x128xf32>
    %176 = arith.addf %113, %133 : vector<2x128xf32>
    %177 = arith.addf %176, %175 : vector<2x128xf32>
    %c0_59 = arith.constant 0 : index
    %c0_60 = arith.constant 0 : index
    %178 = vector.load %arg7[%c0_59, %c0_60] : memref<2x128xf32, #tpu.memory_space<vmem>>, vector<2x128xf32>
    tpu.vector_store %arg7[%c0_59, %c0_60], %177 {strides = array<i32>} : memref<2x128xf32, #tpu.memory_space<vmem>>, vector<2x128xf32>,
    return
  }
}

</mosaic_0001>

<llo_original>
// kernel: tpu_custom_call.1
$region0: #{tpu_custom_call.1}
  #allocation0 [shape = 'u32[]', space=smem, size = 0x4, offset = 0x4, fixed_abs, tag = 'smem constant byte address 0x4 - core index']
  #allocation1 [shape = 'u32[144,128]{1,0:T(1,128)}', space=vmem, size = 0x12000, scoped, tag = 'internal scratch']
  %s0 = inlined_call_operand.hbm [shape: bf16[2,1024], index: 0, kind: input, shape index: {}]
  %s1 = inlined_call_operand.hbm [shape: bf16[1024,256], index: 1, kind: input, shape index: {}]
  %s2 = inlined_call_operand.hbm [shape: bf16[256,256], index: 2, kind: input, shape index: {}]
  %s3 = inlined_call_operand.hbm [shape: bf16[128,128], index: 3, kind: input, shape index: {}]
  %s4 = inlined_call_operand.hbm [shape: bf16[128,128], index: 4, kind: input, shape index: {}]
  %s5 = inlined_call_operand.hbm [shape: bf16[128,128], index: 5, kind: input, shape index: {}]
  %s6 = inlined_call_operand.hbm [shape: f32[9,256], index: 6, kind: input, shape index: {}]
  %s7 = inlined_call_operand.hbm [shape: f32[2,128], index: 7, kind: output, shape index: {}]
  %s8 = sld [smem:[#allocation0]]
  $region66: #{tpu_custom_call.1} parent=0
    _
  %s10 = ssub.s32 1, %s8
  %s11 = scalar_select 0, %s10, %s8
  $region1: #{tpu_custom_call.1} parent=0
    #allocation2 [shape = 'u8[4096]{0}', space=vmem, size = 0x1000, scoped, tag = 'input window, operand 0, single buffered']
    #allocation3 [shape = 's32[1]{0}', space=sflag, size = 0x4, scoped, tag = 'scoped memory for tpu_custom_call.1']
    #allocation4 [shape = 's32[1]{0}', space=sflag, size = 0x4, scoped, tag = 'scoped memory for tpu_custom_call.1']
    #allocation5 [shape = 'u8[524288]{0}', space=vmem, size = 0x80000, scoped, tag = 'input window, operand 1, single buffered']
    #allocation6 [shape = 's32[1]{0}', space=sflag, size = 0x4, scoped, tag = 'scoped memory for tpu_custom_call.1']
    #allocation7 [shape = 'u8[131072]{0}', space=vmem, size = 0x20000, scoped, tag = 'input window, operand 2, single buffered']
    #allocation8 [shape = 'u8[32768]{0}', space=vmem, size = 0x8000, scoped, tag = 'input window, operand 3, single buffered']
    #allocation9 [shape = 's32[1]{0}', space=sflag, size = 0x4, scoped, tag = 'scoped memory for tpu_custom_call.1']
    #allocation10 [shape = 'u8[32768]{0}', space=vmem, size = 0x8000, scoped, tag = 'input window, operand 4, single buffered']
    #allocation11 [shape = 'u8[32768]{0}', space=vmem, size = 0x8000, scoped, tag = 'input window, operand 5, single buffered']
    #allocation12 [shape = 's32[1]{0}', space=sflag, size = 0x4, scoped, tag = 'scoped memory for tpu_custom_call.1']
    #allocation13 [shape = 'u8[16384]{0}', space=vmem, size = 0x4000, scoped, tag = 'input window, operand 6, single buffered']
    #allocation14 [shape = 'u8[1024]{0}', space=vmem, size = 0x400, scoped, tag = 'output window, operand 0, single buffered']
    %12 = vsyncpa [#allocation3], 0
    %13 = vsyncpa [#allocation6], 0
    %14 = vsyncpa [#allocation9], 0
    %15 = vsyncpa [#allocation12], 0
    %16 = vsyncpa [#allocation4], 0
    // Predicated region
    $region2: #{tpu_custom_call.1} parent=1 // pred_check
      _
    $region3: #{tpu_custom_call.1} parent=1 // pred_check_branch
      %18 = sbr.rel (0) target = $region5
    $region4: #{tpu_custom_call.1} parent=1 // pred_region
      %s20 = ssub.s32 128, 128
      %21 = vsyncadd [#allocation3], %s20
      %s23 = sshll.u32 [#allocation2], 4
      %s24 = int_to_ptr.vmem [resolvable:$true] %s23
      %26 = dma.hbm_to_vmem [thread:$0]  %s0, 128, %s24, [#allocation3]
    $region5: #{tpu_custom_call.1} parent=1 // pred_fallthru
      _
    // Predicated region
    $region6: #{tpu_custom_call.1} parent=1 // pred_check
      _
    $region7: #{tpu_custom_call.1} parent=1 // pred_check_branch
      %28 = sbr.rel (0) target = $region9
    $region8: #{tpu_custom_call.1} parent=1 // pred_region
      %s30 = ssub.s32 16384, 16384
      %31 = vsyncadd [#allocation6], %s30
      %s32 = sshll.u32 [#allocation5], 4
      %s33 = int_to_ptr.vmem [resolvable:$true] %s32
      %38 = dma.hbm_to_vmem [thread:$0]  %s1, 16384, %s33, [#allocation6], 128, 128, 8
    $region9: #{tpu_custom_call.1} parent=1 // pred_fallthru
      _
    // Predicated region
    $region10: #{tpu_custom_call.1} parent=1 // pred_check
      _
    $region11: #{tpu_custom_call.1} parent=1 // pred_check_branch
      %40 = sbr.rel (0) target = $region13
    $region12: #{tpu_custom_call.1} parent=1 // pred_region
      %s42 = ssub.s32 4096, 4096
      %43 = vsyncadd [#allocation6], %s42
      %s44 = sshll.u32 [#allocation7], 4
      %s45 = int_to_ptr.vmem [resolvable:$true] %s44
      %50 = dma.hbm_to_vmem [thread:$0]  %s2, 4096, %s45, [#allocation6], 128, 128, 8
    $region13: #{tpu_custom_call.1} parent=1 // pred_fallthru
      _
    // Predicated region
    $region14: #{tpu_custom_call.1} parent=1 // pred_check
      _
    $region15: #{tpu_custom_call.1} parent=1 // pred_check_branch
      %52 = sbr.rel (0) target = $region17
    $region16: #{tpu_custom_call.1} parent=1 // pred_region
      %s54 = ssub.s32 1024, 1024
      %55 = vsyncadd [#allocation9], %s54
      %s56 = sshll.u32 [#allocation8], 4
      %s57 = int_to_ptr.vmem [resolvable:$true] %s56
      %62 = dma.hbm_to_vmem [thread:$0]  %s3, 1024, %s57, [#allocation9], 64, 64, 4
    $region17: #{tpu_custom_call.1} parent=1 // pred_fallthru
      _
    // Predicated region
    $region18: #{tpu_custom_call.1} parent=1 // pred_check
      _
    $region19: #{tpu_custom_call.1} parent=1 // pred_check_branch
      %64 = sbr.rel (0) target = $region21
    $region20: #{tpu_custom_call.1} parent=1 // pred_region
      %s66 = ssub.s32 1024, 1024
      %67 = vsyncadd [#allocation9], %s66
      %s68 = sshll.u32 [#allocation10], 4
      %s69 = int_to_ptr.vmem [resolvable:$true] %s68
      %74 = dma.hbm_to_vmem [thread:$0]  %s4, 1024, %s69, [#allocation9], 64, 64, 4
    $region21: #{tpu_custom_call.1} parent=1 // pred_fallthru
      _
    // Predicated region
    $region22: #{tpu_custom_call.1} parent=1 // pred_check
      _
    $region23: #{tpu_custom_call.1} parent=1 // pred_check_branch
      %76 = sbr.rel (0) target = $region25
    $region24: #{tpu_custom_call.1} parent=1 // pred_region
      %s78 = ssub.s32 1024, 1024
      %79 = vsyncadd [#allocation12], %s78
      %s80 = sshll.u32 [#allocation11], 4
      %s81 = int_to_ptr.vmem [resolvable:$true] %s80
      %86 = dma.hbm_to_vmem [thread:$0]  %s5, 1024, %s81, [#allocation12], 64, 64, 4
    $region25: #{tpu_custom_call.1} parent=1 // pred_fallthru
      _
    // Predicated region
    $region26: #{tpu_custom_call.1} parent=1 // pred_check
      _
    $region27: #{tpu_custom_call.1} parent=1 // pred_check_branch
      %88 = sbr.rel (0) target = $region29
    $region28: #{tpu_custom_call.1} parent=1 // pred_region
      %s90 = ssub.s32 512, 512
      %91 = vsyncadd [#allocation12], %s90
      %s92 = sshll.u32 [#allocation13], 4
      %s93 = int_to_ptr.vmem [resolvable:$true] %s92
      %98 = dma.hbm_to_vmem [thread:$0]  %s6, 512, %s93, [#allocation12], 256, 256, 16
    $region29: #{tpu_custom_call.1} parent=1 // pred_fallthru
      _
    // Predicated region
    $region30: #{tpu_custom_call.1} parent=1 // pred_check
      _
    $region31: #{tpu_custom_call.1} parent=1 // pred_check_branch
      %100 = sbr.rel (0) target = $region33
    $region32: #{tpu_custom_call.1} parent=1 // pred_region
      %101 = dma.done [#allocation3], 128
    $region33: #{tpu_custom_call.1} parent=1 // pred_fallthru
      _
    // Predicated region
    $region34: #{tpu_custom_call.1} parent=1 // pred_check
      _
    $region35: #{tpu_custom_call.1} parent=1 // pred_check_branch
      %103 = sbr.rel (0) target = $region37
    $region36: #{tpu_custom_call.1} parent=1 // pred_region
      %104 = dma.done [#allocation6], 16384
    $region37: #{tpu_custom_call.1} parent=1 // pred_fallthru
      _
    // Predicated region
    $region38: #{tpu_custom_call.1} parent=1 // pred_check
      _
    $region39: #{tpu_custom_call.1} parent=1 // pred_check_branch
      %106 = sbr.rel (0) target = $region41
    $region40: #{tpu_custom_call.1} parent=1 // pred_region
      %107 = dma.done [#allocation6], 4096
    $region41: #{tpu_custom_call.1} parent=1 // pred_fallthru
      _
    // Predicated region
    $region42: #{tpu_custom_call.1} parent=1 // pred_check
      _
    $region43: #{tpu_custom_call.1} parent=1 // pred_check_branch
      %109 = sbr.rel (0) target = $region45
    $region44: #{tpu_custom_call.1} parent=1 // pred_region
      %110 = dma.done [#allocation9], 1024
    $region45: #{tpu_custom_call.1} parent=1 // pred_fallthru
      _
    // Predicated region
    $region46: #{tpu_custom_call.1} parent=1 // pred_check
      _
    $region47: #{tpu_custom_call.1} parent=1 // pred_check_branch
      %112 = sbr.rel (0) target = $region49
    $region48: #{tpu_custom_call.1} parent=1 // pred_region
      %113 = dma.done [#allocation9], 1024
    $region49: #{tpu_custom_call.1} parent=1 // pred_fallthru
      _
    // Predicated region
    $region50: #{tpu_custom_call.1} parent=1 // pred_check
      _
    $region51: #{tpu_custom_call.1} parent=1 // pred_check_branch
      %115 = sbr.rel (0) target = $region53
    $region52: #{tpu_custom_call.1} parent=1 // pred_region
      %116 = dma.done [#allocation12], 1024
    $region53: #{tpu_custom_call.1} parent=1 // pred_fallthru
      _
    // Predicated region
    $region54: #{tpu_custom_call.1} parent=1 // pred_check
      _
    $region55: #{tpu_custom_call.1} parent=1 // pred_check_branch
      %118 = sbr.rel (0) target = $region57
    $region56: #{tpu_custom_call.1} parent=1 // pred_region
      %119 = dma.done [#allocation12], 512
    $region57: #{tpu_custom_call.1} parent=1 // pred_fallthru
      _
    %v121 = vld [vmem:[#allocation13] ss:$8 sm:$0x3]
    %s122 = scalar_lea.vmem [#allocation13], 1
    %v123 = vld [vmem:[%s122] ss:$8 sm:$0x3]
    %s124 = scalar_lea.vmem [#allocation13], 2
    %v125 = vld [vmem:[%s124] ss:$8 sm:$0x3]
    %s126 = scalar_lea.vmem [#allocation13], 3
    %v127 = vld [vmem:[%s126] ss:$8 sm:$0x3]
    %v128 = vld [vmem:[#allocation13 + $0x4] ss:$0 sm:$0xff]
    %v129 = vld [vmem:[#allocation13 + $0x5] ss:$0 sm:$0xff]
    %v130 = vld [vmem:[#allocation13 + $0x6] ss:$0 sm:$0xff]
    %v131 = vld [vmem:[#allocation13 + $0x7] ss:$0 sm:$0xff]
    %v132 = vld [vmem:[#allocation13 + $0x10] ss:$0 sm:$0xff]
    %v133 = vld [vmem:[#allocation2] sm:$0xff]
    %v134 = vld [vmem:[#allocation5] sm:$0xff]
    %v135 = vld [vmem:[#allocation5 + $0x8] sm:$0xff]
    %v136 = vld [vmem:[#allocation5 + $0x10] sm:$0xff]
    %v137 = vld [vmem:[#allocation5 + $0x18] sm:$0xff]
    %v138 = vld [vmem:[#allocation5 + $0x20] sm:$0xff]
    %v139 = vld [vmem:[#allocation5 + $0x28] sm:$0xff]
    %v140 = vld [vmem:[#allocation5 + $0x30] sm:$0xff]
    %v141 = vld [vmem:[#allocation5 + $0x38] sm:$0xff]
    %v142 = vld [vmem:[#allocation5 + $0x40] sm:$0xff]
    %v143 = vld [vmem:[#allocation5 + $0x48] sm:$0xff]
    %v144 = vld [vmem:[#allocation5 + $0x50] sm:$0xff]
    %v145 = vld [vmem:[#allocation5 + $0x58] sm:$0xff]
    %v146 = vld [vmem:[#allocation5 + $0x60] sm:$0xff]
    %v147 = vld [vmem:[#allocation5 + $0x68] sm:$0xff]
    %v148 = vld [vmem:[#allocation5 + $0x70] sm:$0xff]
    %v149 = vld [vmem:[#allocation5 + $0x78] sm:$0xff]
    %v150 = vld [vmem:[#allocation5 + $0x80] sm:$0xff]
    %v151 = vld [vmem:[#allocation5 + $0x88] sm:$0xff]
    %v152 = vld [vmem:[#allocation5 + $0x90] sm:$0xff]
    %v153 = vld [vmem:[#allocation5 + $0x98] sm:$0xff]
    %v154 = vld [vmem:[#allocation5 + $0xa0] sm:$0xff]
    %v155 = vld [vmem:[#allocation5 + $0xa8] sm:$0xff]
    %v156 = vld [vmem:[#allocation5 + $0xb0] sm:$0xff]
    %v157 = vld [vmem:[#allocation5 + $0xb8] sm:$0xff]
    %v158 = vld [vmem:[#allocation5 + $0xc0] sm:$0xff]
    %v159 = vld [vmem:[#allocation5 + $0xc8] sm:$0xff]
    %v160 = vld [vmem:[#allocation5 + $0xd0] sm:$0xff]
    %v161 = vld [vmem:[#allocation5 + $0xd8] sm:$0xff]
    %v162 = vld [vmem:[#allocation5 + $0xe0] sm:$0xff]
    %v163 = vld [vmem:[#allocation5 + $0xe8] sm:$0xff]
    %v164 = vld [vmem:[#allocation5 + $0xf0] sm:$0xff]
    %v165 = vld [vmem:[#allocation5 + $0xf8] sm:$0xff]
    %v166 = vld [vmem:[#allocation5 + $0x100] sm:$0xff]
    %v167 = vld [vmem:[#allocation5 + $0x108] sm:$0xff]
    %v168 = vld [vmem:[#allocation5 + $0x110] sm:$0xff]
    %v169 = vld [vmem:[#allocation5 + $0x118] sm:$0xff]
    %v170 = vld [vmem:[#allocation5 + $0x120] sm:$0xff]
    %v171 = vld [vmem:[#allocation5 + $0x128] sm:$0xff]
    %v172 = vld [vmem:[#allocation5 + $0x130] sm:$0xff]
    %v173 = vld [vmem:[#allocation5 + $0x138] sm:$0xff]
    %v174 = vld [vmem:[#allocation5 + $0x140] sm:$0xff]
    %v175 = vld [vmem:[#allocation5 + $0x148] sm:$0xff]
    %v176 = vld [vmem:[#allocation5 + $0x150] sm:$0xff]
    %v177 = vld [vmem:[#allocation5 + $0x158] sm:$0xff]
    %v178 = vld [vmem:[#allocation5 + $0x160] sm:$0xff]
    %v179 = vld [vmem:[#allocation5 + $0x168] sm:$0xff]
    %v180 = vld [vmem:[#allocation5 + $0x170] sm:$0xff]
    %v181 = vld [vmem:[#allocation5 + $0x178] sm:$0xff]
    %v182 = vld [vmem:[#allocation5 + $0x180] sm:$0xff]
    %v183 = vld [vmem:[#allocation5 + $0x188] sm:$0xff]
    %v184 = vld [vmem:[#allocation5 + $0x190] sm:$0xff]
    %v185 = vld [vmem:[#allocation5 + $0x198] sm:$0xff]
    %v186 = vld [vmem:[#allocation5 + $0x1a0] sm:$0xff]
    %v187 = vld [vmem:[#allocation5 + $0x1a8] sm:$0xff]
    %v188 = vld [vmem:[#allocation5 + $0x1b0] sm:$0xff]
    %v189 = vld [vmem:[#allocation5 + $0x1b8] sm:$0xff]
    %v190 = vld [vmem:[#allocation5 + $0x1c0] sm:$0xff]
    %v191 = vld [vmem:[#allocation5 + $0x1c8] sm:$0xff]
    %v192 = vld [vmem:[#allocation5 + $0x1d0] sm:$0xff]
    %v193 = vld [vmem:[#allocation5 + $0x1d8] sm:$0xff]
    %v194 = vld [vmem:[#allocation5 + $0x1e0] sm:$0xff]
    %v195 = vld [vmem:[#allocation5 + $0x1e8] sm:$0xff]
    %v196 = vld [vmem:[#allocation5 + $0x1f0] sm:$0xff]
    %v197 = vld [vmem:[#allocation5 + $0x1f8] sm:$0xff]
    %v198 = vld [vmem:[#allocation5 + $0x200] sm:$0xff]
    %v199 = vld [vmem:[#allocation5 + $0x208] sm:$0xff]
    %v200 = vld [vmem:[#allocation5 + $0x210] sm:$0xff]
    %v201 = vld [vmem:[#allocation5 + $0x218] sm:$0xff]
    %v202 = vld [vmem:[#allocation5 + $0x220] sm:$0xff]
    %v203 = vld [vmem:[#allocation5 + $0x228] sm:$0xff]
    %v204 = vld [vmem:[#allocation5 + $0x230] sm:$0xff]
    %v205 = vld [vmem:[#allocation5 + $0x238] sm:$0xff]
    %v206 = vld [vmem:[#allocation5 + $0x240] sm:$0xff]
    %v207 = vld [vmem:[#allocation5 + $0x248] sm:$0xff]
    %v208 = vld [vmem:[#allocation5 + $0x250] sm:$0xff]
    %v209 = vld [vmem:[#allocation5 + $0x258] sm:$0xff]
    %v210 = vld [vmem:[#allocation5 + $0x260] sm:$0xff]
    %v211 = vld [vmem:[#allocation5 + $0x268] sm:$0xff]
    %v212 = vld [vmem:[#allocation5 + $0x270] sm:$0xff]
    %v213 = vld [vmem:[#allocation5 + $0x278] sm:$0xff]
    %v214 = vld [vmem:[#allocation5 + $0x280] sm:$0xff]
    %v215 = vld [vmem:[#allocation5 + $0x288] sm:$0xff]
    %v216 = vld [vmem:[#allocation5 + $0x290] sm:$0xff]
    %v217 = vld [vmem:[#allocation5 + $0x298] sm:$0xff]
    %v218 = vld [vmem:[#allocation5 + $0x2a0] sm:$0xff]
    %v219 = vld [vmem:[#allocation5 + $0x2a8] sm:$0xff]
    %v220 = vld [vmem:[#allocation5 + $0x2b0] sm:$0xff]
    %v221 = vld [vmem:[#allocation5 + $0x2b8] sm:$0xff]
    %v222 = vld [vmem:[#allocation5 + $0x2c0] sm:$0xff]
    %v223 = vld [vmem:[#allocation5 + $0x2c8] sm:$0xff]
    %v224 = vld [vmem:[#allocation5 + $0x2d0] sm:$0xff]
    %v225 = vld [vmem:[#allocation5 + $0x2d8] sm:$0xff]
    %v226 = vld [vmem:[#allocation5 + $0x2e0] sm:$0xff]
    %v227 = vld [vmem:[#allocation5 + $0x2e8] sm:$0xff]
    %v228 = vld [vmem:[#allocation5 + $0x2f0] sm:$0xff]
    %v229 = vld [vmem:[#allocation5 + $0x2f8] sm:$0xff]
    %v230 = vld [vmem:[#allocation5 + $0x300] sm:$0xff]
    %v231 = vld [vmem:[#allocation5 + $0x308] sm:$0xff]
    %v232 = vld [vmem:[#allocation5 + $0x310] sm:$0xff]
    %v233 = vld [vmem:[#allocation5 + $0x318] sm:$0xff]
    %v234 = vld [vmem:[#allocation5 + $0x320] sm:$0xff]
    %v235 = vld [vmem:[#allocation5 + $0x328] sm:$0xff]
    %v236 = vld [vmem:[#allocation5 + $0x330] sm:$0xff]
    %v237 = vld [vmem:[#allocation5 + $0x338] sm:$0xff]
    %v238 = vld [vmem:[#allocation5 + $0x340] sm:$0xff]
    %v239 = vld [vmem:[#allocation5 + $0x348] sm:$0xff]
    %v240 = vld [vmem:[#allocation5 + $0x350] sm:$0xff]
    %v241 = vld [vmem:[#allocation5 + $0x358] sm:$0xff]
    %v242 = vld [vmem:[#allocation5 + $0x360] sm:$0xff]
    %v243 = vld [vmem:[#allocation5 + $0x368] sm:$0xff]
    %v244 = vld [vmem:[#allocation5 + $0x370] sm:$0xff]
    %v245 = vld [vmem:[#allocation5 + $0x378] sm:$0xff]
    %v246 = vld [vmem:[#allocation5 + $0x380] sm:$0xff]
    %v247 = vld [vmem:[#allocation5 + $0x388] sm:$0xff]
    %v248 = vld [vmem:[#allocation5 + $0x390] sm:$0xff]
    %v249 = vld [vmem:[#allocation5 + $0x398] sm:$0xff]
    %v250 = vld [vmem:[#allocation5 + $0x3a0] sm:$0xff]
    %v251 = vld [vmem:[#allocation5 + $0x3a8] sm:$0xff]
    %v252 = vld [vmem:[#allocation5 + $0x3b0] sm:$0xff]
    %v253 = vld [vmem:[#allocation5 + $0x3b8] sm:$0xff]
    %v254 = vld [vmem:[#allocation5 + $0x3c0] sm:$0xff]
    %v255 = vld [vmem:[#allocation5 + $0x3c8] sm:$0xff]
    %v256 = vld [vmem:[#allocation5 + $0x3d0] sm:$0xff]
    %v257 = vld [vmem:[#allocation5 + $0x3d8] sm:$0xff]
    %v258 = vld [vmem:[#allocation5 + $0x3e0] sm:$0xff]
    %v259 = vld [vmem:[#allocation5 + $0x3e8] sm:$0xff]
    %v260 = vld [vmem:[#allocation5 + $0x3f0] sm:$0xff]
    %v261 = vld [vmem:[#allocation5 + $0x3f8] sm:$0xff]
    %v263 = vlaneseq
    %v264 = vshrl.u32 %v263, 7
    %v265 = vsub.s32 0, %v264
    %v266 = vrot.slane %v121, %v265
    %v267 = vlaneseq
    %v268 = vshrl.u32 %v267, 7
    %v269 = vsub.s32 1, %v268
    %v270 = vrot.slane %v121, %v269
    %v274 = vcombine.high %v133, %v133
    %v276 = vunpack.c.l.s4 1966171168
    %v277 = vunpack.c.0.s8 %v276
    %v278 = vlaneseq
    %v279 = vshrl.u32 %v278, 7
    %v280 = vsub.s32 %v277, %v279
    %v281 = vrot.slane %v133, %v280
    %v283 = vunpack.c.l.s4 1966171168
    %v284 = vunpack.c.0.s8 %v283
    %v285 = vlaneseq
    %v286 = vshrl.u32 %v285, 7
    %v287 = vsub.s32 %v284, %v286
    %v288 = vrot.slane %v274, %v287
    %v289 = vcombine.high %v281, %v281
    %v290 = vcombine.high %v288, %v288
    %v292 = vunpack.c.l.s4 1966171168
    %v293 = vunpack.c.0.s8 %v292
    %v294 = vlaneseq
    %v295 = vshrl.u32 %v294, 7
    %v296 = vsub.s32 %v293, %v295
    %v297 = vrot.slane %v281, %v296
    %v299 = vunpack.c.l.s4 1966171168
    %v300 = vunpack.c.0.s8 %v299
    %v301 = vlaneseq
    %v302 = vshrl.u32 %v301, 7
    %v303 = vsub.s32 %v300, %v302
    %v304 = vrot.slane %v288, %v303
    %v306 = vunpack.c.l.s4 1966171168
    %v307 = vunpack.c.0.s8 %v306
    %v308 = vlaneseq
    %v309 = vshrl.u32 %v308, 7
    %v310 = vsub.s32 %v307, %v309
    %v311 = vrot.slane %v289, %v310
    %v313 = vunpack.c.l.s4 1966171168
    %v314 = vunpack.c.0.s8 %v313
    %v315 = vlaneseq
    %v316 = vshrl.u32 %v315, 7
    %v317 = vsub.s32 %v314, %v316
    %v318 = vrot.slane %v290, %v317
    %v319 = vcombine.high %v297, %v297
    %v320 = vcombine.high %v304, %v304
    %v321 = vcombine.high %v311, %v311
    %v322 = vcombine.high %v318, %v318
    %v459 = vunpack.c.l.b16 %v134
    %v460 = vunpack.c.h.b16 %v134
    %v461 = vunpack.c.l.b16 %v135
    %v462 = vunpack.c.h.b16 %v135
    %v463 = vunpack.c.l.b16 %v136
    %v464 = vunpack.c.h.b16 %v136
    %v465 = vunpack.c.l.b16 %v137
    %v466 = vunpack.c.h.b16 %v137
    %v467 = vunpack.c.l.b16 %v138
    %v468 = vunpack.c.h.b16 %v138
    %v469 = vunpack.c.l.b16 %v139
    %v470 = vunpack.c.h.b16 %v139
    %v471 = vunpack.c.l.b16 %v140
    %v472 = vunpack.c.h.b16 %v140
    %v473 = vunpack.c.l.b16 %v141
    %v474 = vunpack.c.h.b16 %v141
    %v475 = vunpack.c.l.b16 %v142
    %v476 = vunpack.c.h.b16 %v142
    %v477 = vunpack.c.l.b16 %v143
    %v478 = vunpack.c.h.b16 %v143
    %v479 = vunpack.c.l.b16 %v144
    %v480 = vunpack.c.h.b16 %v144
    %v481 = vunpack.c.l.b16 %v145
    %v482 = vunpack.c.h.b16 %v145
    %v483 = vunpack.c.l.b16 %v146
    %v484 = vunpack.c.h.b16 %v146
    %v485 = vunpack.c.l.b16 %v147
    %v486 = vunpack.c.h.b16 %v147
    %v487 = vunpack.c.l.b16 %v148
    %v488 = vunpack.c.h.b16 %v148
    %v489 = vunpack.c.l.b16 %v149
    %v490 = vunpack.c.h.b16 %v149
    %v491 = vunpack.c.l.b16 %v150
    %v492 = vunpack.c.h.b16 %v150
    %v493 = vunpack.c.l.b16 %v151
    %v494 = vunpack.c.h.b16 %v151
    %v495 = vunpack.c.l.b16 %v152
    %v496 = vunpack.c.h.b16 %v152
    %v497 = vunpack.c.l.b16 %v153
    %v498 = vunpack.c.h.b16 %v153
    %v499 = vunpack.c.l.b16 %v154
    %v500 = vunpack.c.h.b16 %v154
    %v501 = vunpack.c.l.b16 %v155
    %v502 = vunpack.c.h.b16 %v155
    %v503 = vunpack.c.l.b16 %v156
    %v504 = vunpack.c.h.b16 %v156
    %v505 = vunpack.c.l.b16 %v157
    %v506 = vunpack.c.h.b16 %v157
    %v507 = vunpack.c.l.b16 %v158
    %v508 = vunpack.c.h.b16 %v158
    %v509 = vunpack.c.l.b16 %v159
    %v510 = vunpack.c.h.b16 %v159
    %v511 = vunpack.c.l.b16 %v160
    %v512 = vunpack.c.h.b16 %v160
    %v513 = vunpack.c.l.b16 %v161
    %v514 = vunpack.c.h.b16 %v161
    %v515 = vunpack.c.l.b16 %v162
    %v516 = vunpack.c.h.b16 %v162
    %v517 = vunpack.c.l.b16 %v163
    %v518 = vunpack.c.h.b16 %v163
    %v519 = vunpack.c.l.b16 %v164
    %v520 = vunpack.c.h.b16 %v164
    %v521 = vunpack.c.l.b16 %v165
    %v522 = vunpack.c.h.b16 %v165
    %v523 = vunpack.c.l.b16 %v166
    %v524 = vunpack.c.h.b16 %v166
    %v525 = vunpack.c.l.b16 %v167
    %v526 = vunpack.c.h.b16 %v167
    %v527 = vunpack.c.l.b16 %v168
    %v528 = vunpack.c.h.b16 %v168
    %v529 = vunpack.c.l.b16 %v169
    %v530 = vunpack.c.h.b16 %v169
    %v531 = vunpack.c.l.b16 %v170
    %v532 = vunpack.c.h.b16 %v170
    %v533 = vunpack.c.l.b16 %v171
    %v534 = vunpack.c.h.b16 %v171
    %v535 = vunpack.c.l.b16 %v172
    %v536 = vunpack.c.h.b16 %v172
    %v537 = vunpack.c.l.b16 %v173
    %v538 = vunpack.c.h.b16 %v173
    %v539 = vunpack.c.l.b16 %v174
    %v540 = vunpack.c.h.b16 %v174
    %v541 = vunpack.c.l.b16 %v175
    %v542 = vunpack.c.h.b16 %v175
    %v543 = vunpack.c.l.b16 %v176
    %v544 = vunpack.c.h.b16 %v176
    %v545 = vunpack.c.l.b16 %v177
    %v546 = vunpack.c.h.b16 %v177
    %v547 = vunpack.c.l.b16 %v178
    %v548 = vunpack.c.h.b16 %v178
    %v549 = vunpack.c.l.b16 %v179
    %v550 = vunpack.c.h.b16 %v179
    %v551 = vunpack.c.l.b16 %v180
    %v552 = vunpack.c.h.b16 %v180
    %v553 = vunpack.c.l.b16 %v181
    %v554 = vunpack.c.h.b16 %v181
    %v555 = vunpack.c.l.b16 %v182
    %v556 = vunpack.c.h.b16 %v182
    %v557 = vunpack.c.l.b16 %v183
    %v558 = vunpack.c.h.b16 %v183
    %v559 = vunpack.c.l.b16 %v184
    %v560 = vunpack.c.h.b16 %v184
    %v561 = vunpack.c.l.b16 %v185
    %v562 = vunpack.c.h.b16 %v185
    %v563 = vunpack.c.l.b16 %v186
    %v564 = vunpack.c.h.b16 %v186
    %v565 = vunpack.c.l.b16 %v187
    %v566 = vunpack.c.h.b16 %v187
    %v567 = vunpack.c.l.b16 %v188
    %v568 = vunpack.c.h.b16 %v188
    %v569 = vunpack.c.l.b16 %v189
    %v570 = vunpack.c.h.b16 %v189
    %v571 = vunpack.c.l.b16 %v190
    %v572 = vunpack.c.h.b16 %v190
    %v573 = vunpack.c.l.b16 %v191
    %v574 = vunpack.c.h.b16 %v191
    %v575 = vunpack.c.l.b16 %v192
    %v576 = vunpack.c.h.b16 %v192
    %v577 = vunpack.c.l.b16 %v193
    %v578 = vunpack.c.h.b16 %v193
    %v579 = vunpack.c.l.b16 %v194
    %v580 = vunpack.c.h.b16 %v194
    %v581 = vunpack.c.l.b16 %v195
    %v582 = vunpack.c.h.b16 %v195
    %v583 = vunpack.c.l.b16 %v196
    %v584 = vunpack.c.h.b16 %v196
    %v585 = vunpack.c.l.b16 %v197
    %v586 = vunpack.c.h.b16 %v197
    %v587 = vunpack.c.l.b16 %v198
    %v588 = vunpack.c.h.b16 %v198
    %v589 = vunpack.c.l.b16 %v199
    %v590 = vunpack.c.h.b16 %v199
    %v591 = vunpack.c.l.b16 %v200
    %v592 = vunpack.c.h.b16 %v200
    %v593 = vunpack.c.l.b16 %v201
    %v594 = vunpack.c.h.b16 %v201
    %v595 = vunpack.c.l.b16 %v202
    %v596 = vunpack.c.h.b16 %v202
    %v597 = vunpack.c.l.b16 %v203
    %v598 = vunpack.c.h.b16 %v203
    %v599 = vunpack.c.l.b16 %v204
    %v600 = vunpack.c.h.b16 %v204
    %v601 = vunpack.c.l.b16 %v205
    %v602 = vunpack.c.h.b16 %v205
    %v603 = vunpack.c.l.b16 %v206
    %v604 = vunpack.c.h.b16 %v206
    %v605 = vunpack.c.l.b16 %v207
    %v606 = vunpack.c.h.b16 %v207
    %v607 = vunpack.c.l.b16 %v208
    %v608 = vunpack.c.h.b16 %v208
    %v609 = vunpack.c.l.b16 %v209
    %v610 = vunpack.c.h.b16 %v209
    %v611 = vunpack.c.l.b16 %v210
    %v612 = vunpack.c.h.b16 %v210
    %v613 = vunpack.c.l.b16 %v211
    %v614 = vunpack.c.h.b16 %v211
    %v615 = vunpack.c.l.b16 %v212
    %v616 = vunpack.c.h.b16 %v212
    %v617 = vunpack.c.l.b16 %v213
    %v618 = vunpack.c.h.b16 %v213
    %v619 = vunpack.c.l.b16 %v214
    %v620 = vunpack.c.h.b16 %v214
    %v621 = vunpack.c.l.b16 %v215
    %v622 = vunpack.c.h.b16 %v215
    %v623 = vunpack.c.l.b16 %v216
    %v624 = vunpack.c.h.b16 %v216
    %v625 = vunpack.c.l.b16 %v217
    %v626 = vunpack.c.h.b16 %v217
    %v627 = vunpack.c.l.b16 %v218
    %v628 = vunpack.c.h.b16 %v218
    %v629 = vunpack.c.l.b16 %v219
    %v630 = vunpack.c.h.b16 %v219
    %v631 = vunpack.c.l.b16 %v220
    %v632 = vunpack.c.h.b16 %v220
    %v633 = vunpack.c.l.b16 %v221
    %v634 = vunpack.c.h.b16 %v221
    %v635 = vunpack.c.l.b16 %v222
    %v636 = vunpack.c.h.b16 %v222
    %v637 = vunpack.c.l.b16 %v223
    %v638 = vunpack.c.h.b16 %v223
    %v639 = vunpack.c.l.b16 %v224
    %v640 = vunpack.c.h.b16 %v224
    %v641 = vunpack.c.l.b16 %v225
    %v642 = vunpack.c.h.b16 %v225
    %v643 = vunpack.c.l.b16 %v226
    %v644 = vunpack.c.h.b16 %v226
    %v645 = vunpack.c.l.b16 %v227
    %v646 = vunpack.c.h.b16 %v227
    %v647 = vunpack.c.l.b16 %v228
    %v648 = vunpack.c.h.b16 %v228
    %v649 = vunpack.c.l.b16 %v229
    %v650 = vunpack.c.h.b16 %v229
    %v651 = vunpack.c.l.b16 %v230
    %v652 = vunpack.c.h.b16 %v230
    %v653 = vunpack.c.l.b16 %v231
    %v654 = vunpack.c.h.b16 %v231
    %v655 = vunpack.c.l.b16 %v232
    %v656 = vunpack.c.h.b16 %v232
    %v657 = vunpack.c.l.b16 %v233
    %v658 = vunpack.c.h.b16 %v233
    %v659 = vunpack.c.l.b16 %v234
    %v660 = vunpack.c.h.b16 %v234
    %v661 = vunpack.c.l.b16 %v235
    %v662 = vunpack.c.h.b16 %v235
    %v663 = vunpack.c.l.b16 %v236
    %v664 = vunpack.c.h.b16 %v236
    %v665 = vunpack.c.l.b16 %v237
    %v666 = vunpack.c.h.b16 %v237
    %v667 = vunpack.c.l.b16 %v238
    %v668 = vunpack.c.h.b16 %v238
    %v669 = vunpack.c.l.b16 %v239
    %v670 = vunpack.c.h.b16 %v239
    %v671 = vunpack.c.l.b16 %v240
    %v672 = vunpack.c.h.b16 %v240
    %v673 = vunpack.c.l.b16 %v241
    %v674 = vunpack.c.h.b16 %v241
    %v675 = vunpack.c.l.b16 %v242
    %v676 = vunpack.c.h.b16 %v242
    %v677 = vunpack.c.l.b16 %v243
    %v678 = vunpack.c.h.b16 %v243
    %v679 = vunpack.c.l.b16 %v244
    %v680 = vunpack.c.h.b16 %v244
    %v681 = vunpack.c.l.b16 %v245
    %v682 = vunpack.c.h.b16 %v245
    %v683 = vunpack.c.l.b16 %v246
    %v684 = vunpack.c.h.b16 %v246
    %v685 = vunpack.c.l.b16 %v247
    %v686 = vunpack.c.h.b16 %v247
    %v687 = vunpack.c.l.b16 %v248
    %v688 = vunpack.c.h.b16 %v248
    %v689 = vunpack.c.l.b16 %v249
    %v690 = vunpack.c.h.b16 %v249
    %v691 = vunpack.c.l.b16 %v250
    %v692 = vunpack.c.h.b16 %v250
    %v693 = vunpack.c.l.b16 %v251
    %v694 = vunpack.c.h.b16 %v251
    %v695 = vunpack.c.l.b16 %v252
    %v696 = vunpack.c.h.b16 %v252
    %v697 = vunpack.c.l.b16 %v253
    %v698 = vunpack.c.h.b16 %v253
    %v699 = vunpack.c.l.b16 %v254
    %v700 = vunpack.c.h.b16 %v254
    %v701 = vunpack.c.l.b16 %v255
    %v702 = vunpack.c.h.b16 %v255
    %v703 = vunpack.c.l.b16 %v256
    %v704 = vunpack.c.h.b16 %v256
    %v705 = vunpack.c.l.b16 %v257
    %v706 = vunpack.c.h.b16 %v257
    %v707 = vunpack.c.l.b16 %v258
    %v708 = vunpack.c.h.b16 %v258
    %v709 = vunpack.c.l.b16 %v259
    %v710 = vunpack.c.h.b16 %v259
    %v711 = vunpack.c.l.b16 %v260
    %v712 = vunpack.c.h.b16 %v260
    %v713 = vunpack.c.l.b16 %v261
    %v714 = vunpack.c.h.b16 %v261
    %v715 = vpack.c.b16 %v461, %v459
    %v716 = vpack.c.b16 %v462, %v460
    %v717 = vpack.c.b16 %v465, %v463
    %v718 = vpack.c.b16 %v466, %v464
    %v719 = vpack.c.b16 %v469, %v467
    %v720 = vpack.c.b16 %v470, %v468
    %v721 = vpack.c.b16 %v473, %v471
    %v722 = vpack.c.b16 %v474, %v472
    %v723 = vpack.c.b16 %v477, %v475
    %v724 = vpack.c.b16 %v478, %v476
    %v725 = vpack.c.b16 %v481, %v479
    %v726 = vpack.c.b16 %v482, %v480
    %v727 = vpack.c.b16 %v485, %v483
    %v728 = vpack.c.b16 %v486, %v484
    %v729 = vpack.c.b16 %v489, %v487
    %v730 = vpack.c.b16 %v490, %v488
    %v731 = vpack.c.b16 %v493, %v491
    %v732 = vpack.c.b16 %v494, %v492
    %v733 = vpack.c.b16 %v497, %v495
    %v734 = vpack.c.b16 %v498, %v496
    %v735 = vpack.c.b16 %v501, %v499
    %v736 = vpack.c.b16 %v502, %v500
    %v737 = vpack.c.b16 %v505, %v503
    %v738 = vpack.c.b16 %v506, %v504
    %v739 = vpack.c.b16 %v509, %v507
    %v740 = vpack.c.b16 %v510, %v508
    %v741 = vpack.c.b16 %v513, %v511
    %v742 = vpack.c.b16 %v514, %v512
    %v743 = vpack.c.b16 %v517, %v515
    %v744 = vpack.c.b16 %v518, %v516
    %v745 = vpack.c.b16 %v521, %v519
    %v746 = vpack.c.b16 %v522, %v520
    %v747 = vpack.c.b16 %v525, %v523
    %v748 = vpack.c.b16 %v526, %v524
    %v749 = vpack.c.b16 %v529, %v527
    %v750 = vpack.c.b16 %v530, %v528
    %v751 = vpack.c.b16 %v533, %v531
    %v752 = vpack.c.b16 %v534, %v532
    %v753 = vpack.c.b16 %v537, %v535
    %v754 = vpack.c.b16 %v538, %v536
    %v755 = vpack.c.b16 %v541, %v539
    %v756 = vpack.c.b16 %v542, %v540
    %v757 = vpack.c.b16 %v545, %v543
    %v758 = vpack.c.b16 %v546, %v544
    %v759 = vpack.c.b16 %v549, %v547
    %v760 = vpack.c.b16 %v550, %v548
    %v761 = vpack.c.b16 %v553, %v551
    %v762 = vpack.c.b16 %v554, %v552
    %v763 = vpack.c.b16 %v557, %v555
    %v764 = vpack.c.b16 %v558, %v556
    %v765 = vpack.c.b16 %v561, %v559
    %v766 = vpack.c.b16 %v562, %v560
    %v767 = vpack.c.b16 %v565, %v563
    %v768 = vpack.c.b16 %v566, %v564
    %v769 = vpack.c.b16 %v569, %v567
    %v770 = vpack.c.b16 %v570, %v568
    %v771 = vpack.c.b16 %v573, %v571
    %v772 = vpack.c.b16 %v574, %v572
    %v773 = vpack.c.b16 %v577, %v575
    %v774 = vpack.c.b16 %v578, %v576
    %v775 = vpack.c.b16 %v581, %v579
    %v776 = vpack.c.b16 %v582, %v580
    %v777 = vpack.c.b16 %v585, %v583
    %v778 = vpack.c.b16 %v586, %v584
    %v779 = vpack.c.b16 %v589, %v587
    %v780 = vpack.c.b16 %v590, %v588
    %v781 = vpack.c.b16 %v593, %v591
    %v782 = vpack.c.b16 %v594, %v592
    %v783 = vpack.c.b16 %v597, %v595
    %v784 = vpack.c.b16 %v598, %v596
    %v785 = vpack.c.b16 %v601, %v599
    %v786 = vpack.c.b16 %v602, %v600
    %v787 = vpack.c.b16 %v605, %v603
    %v788 = vpack.c.b16 %v606, %v604
    %v789 = vpack.c.b16 %v609, %v607
    %v790 = vpack.c.b16 %v610, %v608
    %v791 = vpack.c.b16 %v613, %v611
    %v792 = vpack.c.b16 %v614, %v612
    %v793 = vpack.c.b16 %v617, %v615
    %v794 = vpack.c.b16 %v618, %v616
    %v795 = vpack.c.b16 %v621, %v619
    %v796 = vpack.c.b16 %v622, %v620
    %v797 = vpack.c.b16 %v625, %v623
    %v798 = vpack.c.b16 %v626, %v624
    %v799 = vpack.c.b16 %v629, %v627
    %v800 = vpack.c.b16 %v630, %v628
    %v801 = vpack.c.b16 %v633, %v631
    %v802 = vpack.c.b16 %v634, %v632
    %v803 = vpack.c.b16 %v637, %v635
    %v804 = vpack.c.b16 %v638, %v636
    %v805 = vpack.c.b16 %v641, %v639
    %v806 = vpack.c.b16 %v642, %v640
    %v807 = vpack.c.b16 %v645, %v643
    %v808 = vpack.c.b16 %v646, %v644
    %v809 = vpack.c.b16 %v649, %v647
    %v810 = vpack.c.b16 %v650, %v648
    %v811 = vpack.c.b16 %v653, %v651
    %v812 = vpack.c.b16 %v654, %v652
    %v813 = vpack.c.b16 %v657, %v655
    %v814 = vpack.c.b16 %v658, %v656
    %v815 = vpack.c.b16 %v661, %v659
    %v816 = vpack.c.b16 %v662, %v660
    %v817 = vpack.c.b16 %v665, %v663
    %v818 = vpack.c.b16 %v666, %v664
    %v819 = vpack.c.b16 %v669, %v667
    %v820 = vpack.c.b16 %v670, %v668
    %v821 = vpack.c.b16 %v673, %v671
    %v822 = vpack.c.b16 %v674, %v672
    %v823 = vpack.c.b16 %v677, %v675
    %v824 = vpack.c.b16 %v678, %v676
    %v825 = vpack.c.b16 %v681, %v679
    %v826 = vpack.c.b16 %v682, %v680
    %v827 = vpack.c.b16 %v685, %v683
    %v828 = vpack.c.b16 %v686, %v684
    %v829 = vpack.c.b16 %v689, %v687
    %v830 = vpack.c.b16 %v690, %v688
    %v831 = vpack.c.b16 %v693, %v691
    %v832 = vpack.c.b16 %v694, %v692
    %v833 = vpack.c.b16 %v697, %v695
    %v834 = vpack.c.b16 %v698, %v696
    %v835 = vpack.c.b16 %v701, %v699
    %v836 = vpack.c.b16 %v702, %v700
    %v837 = vpack.c.b16 %v705, %v703
    %v838 = vpack.c.b16 %v706, %v704
    %v839 = vpack.c.b16 %v709, %v707
    %v840 = vpack.c.b16 %v710, %v708
    %v841 = vpack.c.b16 %v713, %v711
    %v842 = vpack.c.b16 %v714, %v712
    %971 = vmatprep.subr.bf16.mxu0 %v716
    %972 = vmatpush1.bf16.msra.mxu0 %v715
    %973 = vmatprep.subr.bf16.mxu0 %v718
    %974 = vmatpush1.bf16.msra.mxu0 %v717
    %975 = vmatprep.subr.bf16.mxu0 %v720
    %976 = vmatpush1.bf16.msra.mxu0 %v719
    %977 = vmatprep.subr.bf16.mxu0 %v722
    %978 = vmatpush1.bf16.msra.mxu0 %v721
    %979 = vmatprep.subr.bf16.mxu0 %v724
    %980 = vmatpush1.bf16.msra.mxu0 %v723
    %981 = vmatprep.subr.bf16.mxu0 %v726
    %982 = vmatpush1.bf16.msra.mxu0 %v725
    %983 = vmatprep.subr.bf16.mxu0 %v728
    %984 = vmatpush1.bf16.msra.mxu0 %v727
    %985 = vmatprep.subr.bf16.mxu0 %v730
    %986 = vmatpush1.bf16.msra.mxu0 %v729
    %987 = vmatprep.subr.bf16.mxu0 %v732
    %988 = vmatpush1.bf16.msra.mxu0 %v731
    %989 = vmatprep.subr.bf16.mxu0 %v734
    %990 = vmatpush1.bf16.msra.mxu0 %v733
    %991 = vmatprep.subr.bf16.mxu0 %v736
    %992 = vmatpush1.bf16.msra.mxu0 %v735
    %993 = vmatprep.subr.bf16.mxu0 %v738
    %994 = vmatpush1.bf16.msra.mxu0 %v737
    %995 = vmatprep.subr.bf16.mxu0 %v740
    %996 = vmatpush1.bf16.msra.mxu0 %v739
    %997 = vmatprep.subr.bf16.mxu0 %v742
    %998 = vmatpush1.bf16.msra.mxu0 %v741
    %999 = vmatprep.subr.bf16.mxu0 %v744
    %1000 = vmatpush1.bf16.msra.mxu0 %v743
    %1001 = vmatprep.subr.bf16.mxu0 %v746
    %1002 = vmatpush1.bf16.msra.mxu0 %v745
    %1003 = vmatprep.mubr.bf16.mxu0 %v311
    %1004 = vmatmul.mubr.bf16.gmra.mrb[0].mxu0 %v297
    %v1005 = vpop.f32.mrb[0].mxu0
    %v1006 = vadd.f32 %v266, %v1005
    %v1007 = vpop.f32.mrb[0].mxu0
    %v1008 = vadd.f32 %v270, %v1007
    %v1009 = vpop.f32.mrb[0].mxu0
    %v1010 = vpop.f32.mrb[0].mxu0
    %1011 = vdwg.mxu0
    %1012 = vmatprep.subr.bf16.mxu0 %v748
    %1013 = vmatpush1.bf16.msra.mxu0 %v747
    %1014 = vmatprep.subr.bf16.mxu0 %v750
    %1015 = vmatpush1.bf16.msra.mxu0 %v749
    %1016 = vmatprep.subr.bf16.mxu0 %v752
    %1017 = vmatpush1.bf16.msra.mxu0 %v751
    %1018 = vmatprep.subr.bf16.mxu0 %v754
    %1019 = vmatpush1.bf16.msra.mxu0 %v753
    %1020 = vmatprep.subr.bf16.mxu0 %v756
    %1021 = vmatpush1.bf16.msra.mxu0 %v755
    %1022 = vmatprep.subr.bf16.mxu0 %v758
    %1023 = vmatpush1.bf16.msra.mxu0 %v757
    %1024 = vmatprep.subr.bf16.mxu0 %v760
    %1025 = vmatpush1.bf16.msra.mxu0 %v759
    %1026 = vmatprep.subr.bf16.mxu0 %v762
    %1027 = vmatpush1.bf16.msra.mxu0 %v761
    %1028 = vmatprep.subr.bf16.mxu0 %v764
    %1029 = vmatpush1.bf16.msra.mxu0 %v763
    %1030 = vmatprep.subr.bf16.mxu0 %v766
    %1031 = vmatpush1.bf16.msra.mxu0 %v765
    %1032 = vmatprep.subr.bf16.mxu0 %v768
    %1033 = vmatpush1.bf16.msra.mxu0 %v767
    %1034 = vmatprep.subr.bf16.mxu0 %v770
    %1035 = vmatpush1.bf16.msra.mxu0 %v769
    %1036 = vmatprep.subr.bf16.mxu0 %v772
    %1037 = vmatpush1.bf16.msra.mxu0 %v771
    %1038 = vmatprep.subr.bf16.mxu0 %v774
    %1039 = vmatpush1.bf16.msra.mxu0 %v773
    %1040 = vmatprep.subr.bf16.mxu0 %v776
    %1041 = vmatpush1.bf16.msra.mxu0 %v775
    %1042 = vmatprep.subr.bf16.mxu0 %v778
    %1043 = vmatpush1.bf16.msra.mxu0 %v777
    %1044 = vmatprep.mubr.bf16.mxu0 %v321
    %1045 = vmatmul.mubr.bf16.gmra.mrb[0].mxu0 %v319
    %v1046 = vpop.f32.mrb[0].mxu0
    %v1047 = vadd.f32 %v1006, %v1046
    %v1048 = vpop.f32.mrb[0].mxu0
    %v1049 = vadd.f32 %v1008, %v1048
    %v1050 = vpop.f32.mrb[0].mxu0
    %v1051 = vpop.f32.mrb[0].mxu0
    %1052 = vdwg.mxu0
    %1053 = vmatprep.subr.bf16.mxu0 %v780
    %1054 = vmatpush1.bf16.msra.mxu0 %v779
    %1055 = vmatprep.subr.bf16.mxu0 %v782
    %1056 = vmatpush1.bf16.msra.mxu0 %v781
    %1057 = vmatprep.subr.bf16.mxu0 %v784
    %1058 = vmatpush1.bf16.msra.mxu0 %v783
    %1059 = vmatprep.subr.bf16.mxu0 %v786
    %1060 = vmatpush1.bf16.msra.mxu0 %v785
    %1061 = vmatprep.subr.bf16.mxu0 %v788
    %1062 = vmatpush1.bf16.msra.mxu0 %v787
    %1063 = vmatprep.subr.bf16.mxu0 %v790
    %1064 = vmatpush1.bf16.msra.mxu0 %v789
    %1065 = vmatprep.subr.bf16.mxu0 %v792
    %1066 = vmatpush1.bf16.msra.mxu0 %v791
    %1067 = vmatprep.subr.bf16.mxu0 %v794
    %1068 = vmatpush1.bf16.msra.mxu0 %v793
    %1069 = vmatprep.subr.bf16.mxu0 %v796
    %1070 = vmatpush1.bf16.msra.mxu0 %v795
    %1071 = vmatprep.subr.bf16.mxu0 %v798
    %1072 = vmatpush1.bf16.msra.mxu0 %v797
    %1073 = vmatprep.subr.bf16.mxu0 %v800
    %1074 = vmatpush1.bf16.msra.mxu0 %v799
    %1075 = vmatprep.subr.bf16.mxu0 %v802
    %1076 = vmatpush1.bf16.msra.mxu0 %v801
    %1077 = vmatprep.subr.bf16.mxu0 %v804
    %1078 = vmatpush1.bf16.msra.mxu0 %v803
    %1079 = vmatprep.subr.bf16.mxu0 %v806
    %1080 = vmatpush1.bf16.msra.mxu0 %v805
    %1081 = vmatprep.subr.bf16.mxu0 %v808
    %1082 = vmatpush1.bf16.msra.mxu0 %v807
    %1083 = vmatprep.subr.bf16.mxu0 %v810
    %1084 = vmatpush1.bf16.msra.mxu0 %v809
    %1085 = vmatprep.mubr.bf16.mxu0 %v318
    %1086 = vmatmul.mubr.bf16.gmra.mrb[0].mxu0 %v304
    %v1087 = vpop.f32.mrb[0].mxu0
    %v1088 = vadd.f32 %v1047, %v1087
    %v1089 = vpop.f32.mrb[0].mxu0
    %v1090 = vadd.f32 %v1049, %v1089
    %v1091 = vpop.f32.mrb[0].mxu0
    %v1092 = vpop.f32.mrb[0].mxu0
    %1093 = vdwg.mxu0
    %1094 = vmatprep.subr.bf16.mxu0 %v812
    %1095 = vmatpush1.bf16.msra.mxu0 %v811
    %1096 = vmatprep.subr.bf16.mxu0 %v814
    %1097 = vmatpush1.bf16.msra.mxu0 %v813
    %1098 = vmatprep.subr.bf16.mxu0 %v816
    %1099 = vmatpush1.bf16.msra.mxu0 %v815
    %1100 = vmatprep.subr.bf16.mxu0 %v818
    %1101 = vmatpush1.bf16.msra.mxu0 %v817
    %1102 = vmatprep.subr.bf16.mxu0 %v820
    %1103 = vmatpush1.bf16.msra.mxu0 %v819
    %1104 = vmatprep.subr.bf16.mxu0 %v822
    %1105 = vmatpush1.bf16.msra.mxu0 %v821
    %1106 = vmatprep.subr.bf16.mxu0 %v824
    %1107 = vmatpush1.bf16.msra.mxu0 %v823
    %1108 = vmatprep.subr.bf16.mxu0 %v826
    %1109 = vmatpush1.bf16.msra.mxu0 %v825
    %1110 = vmatprep.subr.bf16.mxu0 %v828
    %1111 = vmatpush1.bf16.msra.mxu0 %v827
    %1112 = vmatprep.subr.bf16.mxu0 %v830
    %1113 = vmatpush1.bf16.msra.mxu0 %v829
    %1114 = vmatprep.subr.bf16.mxu0 %v832
    %1115 = vmatpush1.bf16.msra.mxu0 %v831
    %1116 = vmatprep.subr.bf16.mxu0 %v834
    %1117 = vmatpush1.bf16.msra.mxu0 %v833
    %1118 = vmatprep.subr.bf16.mxu0 %v836
    %1119 = vmatpush1.bf16.msra.mxu0 %v835
    %1120 = vmatprep.subr.bf16.mxu0 %v838
    %1121 = vmatpush1.bf16.msra.mxu0 %v837
    %1122 = vmatprep.subr.bf16.mxu0 %v840
    %1123 = vmatpush1.bf16.msra.mxu0 %v839
    %1124 = vmatprep.subr.bf16.mxu0 %v842
    %1125 = vmatpush1.bf16.msra.mxu0 %v841
    %1126 = vmatprep.mubr.bf16.mxu0 %v322
    %1127 = vmatmul.mubr.bf16.gmra.mrb[0].mxu0 %v320
    %v1128 = vpop.f32.mrb[0].mxu0
    %v1129 = vadd.f32 %v1088, %v1128
    %v1130 = vpop.f32.mrb[0].mxu0
    %v1131 = vadd.f32 %v1090, %v1130
    %v1132 = vpop.f32.mrb[0].mxu0
    %v1133 = vpop.f32.mrb[0].mxu0
    %1134 = vdwg.mxu0
    %v1135 = vpack.c.bf16 %v1129, %v1129
    %v1136 = vpack.c.bf16 %v1131, %v1131
    %v1137 = vld [vmem:[#allocation7] sm:$0xff]
    %v1138 = vld [vmem:[#allocation7 + $0x8] sm:$0xff]
    %v1139 = vld [vmem:[#allocation7 + $0x10] sm:$0xff]
    %v1140 = vld [vmem:[#allocation7 + $0x18] sm:$0xff]
    %v1141 = vld [vmem:[#allocation7 + $0x20] sm:$0xff]
    %v1142 = vld [vmem:[#allocation7 + $0x28] sm:$0xff]
    %v1143 = vld [vmem:[#allocation7 + $0x30] sm:$0xff]
    %v1144 = vld [vmem:[#allocation7 + $0x38] sm:$0xff]
    %v1145 = vld [vmem:[#allocation7 + $0x40] sm:$0xff]
    %v1146 = vld [vmem:[#allocation7 + $0x48] sm:$0xff]
    %v1147 = vld [vmem:[#allocation7 + $0x50] sm:$0xff]
    %v1148 = vld [vmem:[#allocation7 + $0x58] sm:$0xff]
    %v1149 = vld [vmem:[#allocation7 + $0x60] sm:$0xff]
    %v1150 = vld [vmem:[#allocation7 + $0x68] sm:$0xff]
    %v1151 = vld [vmem:[#allocation7 + $0x70] sm:$0xff]
    %v1152 = vld [vmem:[#allocation7 + $0x78] sm:$0xff]
    %v1153 = vld [vmem:[#allocation7 + $0x80] sm:$0xff]
    %v1154 = vld [vmem:[#allocation7 + $0x88] sm:$0xff]
    %v1155 = vld [vmem:[#allocation7 + $0x90] sm:$0xff]
    %v1156 = vld [vmem:[#allocation7 + $0x98] sm:$0xff]
    %v1157 = vld [vmem:[#allocation7 + $0xa0] sm:$0xff]
    %v1158 = vld [vmem:[#allocation7 + $0xa8] sm:$0xff]
    %v1159 = vld [vmem:[#allocation7 + $0xb0] sm:$0xff]
    %v1160 = vld [vmem:[#allocation7 + $0xb8] sm:$0xff]
    %v1161 = vld [vmem:[#allocation7 + $0xc0] sm:$0xff]
    %v1162 = vld [vmem:[#allocation7 + $0xc8] sm:$0xff]
    %v1163 = vld [vmem:[#allocation7 + $0xd0] sm:$0xff]
    %v1164 = vld [vmem:[#allocation7 + $0xd8] sm:$0xff]
    %v1165 = vld [vmem:[#allocation7 + $0xe0] sm:$0xff]
    %v1166 = vld [vmem:[#allocation7 + $0xe8] sm:$0xff]
    %v1167 = vld [vmem:[#allocation7 + $0xf0] sm:$0xff]
    %v1168 = vld [vmem:[#allocation7 + $0xf8] sm:$0xff]
    %v1170 = vlaneseq
    %v1171 = vshrl.u32 %v1170, 7
    %v1172 = vsub.s32 0, %v1171
    %v1173 = vrot.slane %v123, %v1172
    %v1174 = vlaneseq
    %v1175 = vshrl.u32 %v1174, 7
    %v1176 = vsub.s32 1, %v1175
    %v1177 = vrot.slane %v123, %v1176
    %v1212 = vunpack.c.l.b16 %v1137
    %v1213 = vunpack.c.h.b16 %v1137
    %v1214 = vunpack.c.l.b16 %v1138
    %v1215 = vunpack.c.h.b16 %v1138
    %v1216 = vunpack.c.l.b16 %v1139
    %v1217 = vunpack.c.h.b16 %v1139
    %v1218 = vunpack.c.l.b16 %v1140
    %v1219 = vunpack.c.h.b16 %v1140
    %v1220 = vunpack.c.l.b16 %v1141
    %v1221 = vunpack.c.h.b16 %v1141
    %v1222 = vunpack.c.l.b16 %v1142
    %v1223 = vunpack.c.h.b16 %v1142
    %v1224 = vunpack.c.l.b16 %v1143
    %v1225 = vunpack.c.h.b16 %v1143
    %v1226 = vunpack.c.l.b16 %v1144
    %v1227 = vunpack.c.h.b16 %v1144
    %v1228 = vunpack.c.l.b16 %v1145
    %v1229 = vunpack.c.h.b16 %v1145
    %v1230 = vunpack.c.l.b16 %v1146
    %v1231 = vunpack.c.h.b16 %v1146
    %v1232 = vunpack.c.l.b16 %v1147
    %v1233 = vunpack.c.h.b16 %v1147
    %v1234 = vunpack.c.l.b16 %v1148
    %v1235 = vunpack.c.h.b16 %v1148
    %v1236 = vunpack.c.l.b16 %v1149
    %v1237 = vunpack.c.h.b16 %v1149
    %v1238 = vunpack.c.l.b16 %v1150
    %v1239 = vunpack.c.h.b16 %v1150
    %v1240 = vunpack.c.l.b16 %v1151
    %v1241 = vunpack.c.h.b16 %v1151
    %v1242 = vunpack.c.l.b16 %v1152
    %v1243 = vunpack.c.h.b16 %v1152
    %v1244 = vunpack.c.l.b16 %v1153
    %v1245 = vunpack.c.h.b16 %v1153
    %v1246 = vunpack.c.l.b16 %v1154
    %v1247 = vunpack.c.h.b16 %v1154
    %v1248 = vunpack.c.l.b16 %v1155
    %v1249 = vunpack.c.h.b16 %v1155
    %v1250 = vunpack.c.l.b16 %v1156
    %v1251 = vunpack.c.h.b16 %v1156
    %v1252 = vunpack.c.l.b16 %v1157
    %v1253 = vunpack.c.h.b16 %v1157
    %v1254 = vunpack.c.l.b16 %v1158
    %v1255 = vunpack.c.h.b16 %v1158
    %v1256 = vunpack.c.l.b16 %v1159
    %v1257 = vunpack.c.h.b16 %v1159
    %v1258 = vunpack.c.l.b16 %v1160
    %v1259 = vunpack.c.h.b16 %v1160
    %v1260 = vunpack.c.l.b16 %v1161
    %v1261 = vunpack.c.h.b16 %v1161
    %v1262 = vunpack.c.l.b16 %v1162
    %v1263 = vunpack.c.h.b16 %v1162
    %v1264 = vunpack.c.l.b16 %v1163
    %v1265 = vunpack.c.h.b16 %v1163
    %v1266 = vunpack.c.l.b16 %v1164
    %v1267 = vunpack.c.h.b16 %v1164
    %v1268 = vunpack.c.l.b16 %v1165
    %v1269 = vunpack.c.h.b16 %v1165
    %v1270 = vunpack.c.l.b16 %v1166
    %v1271 = vunpack.c.h.b16 %v1166
    %v1272 = vunpack.c.l.b16 %v1167
    %v1273 = vunpack.c.h.b16 %v1167
    %v1274 = vunpack.c.l.b16 %v1168
    %v1275 = vunpack.c.h.b16 %v1168
    %v1276 = vpack.c.b16 %v1214, %v1212
    %v1277 = vpack.c.b16 %v1215, %v1213
    %v1278 = vpack.c.b16 %v1218, %v1216
    %v1279 = vpack.c.b16 %v1219, %v1217
    %v1280 = vpack.c.b16 %v1222, %v1220
    %v1281 = vpack.c.b16 %v1223, %v1221
    %v1282 = vpack.c.b16 %v1226, %v1224
    %v1283 = vpack.c.b16 %v1227, %v1225
    %v1284 = vpack.c.b16 %v1230, %v1228
    %v1285 = vpack.c.b16 %v1231, %v1229
    %v1286 = vpack.c.b16 %v1234, %v1232
    %v1287 = vpack.c.b16 %v1235, %v1233
    %v1288 = vpack.c.b16 %v1238, %v1236
    %v1289 = vpack.c.b16 %v1239, %v1237
    %v1290 = vpack.c.b16 %v1242, %v1240
    %v1291 = vpack.c.b16 %v1243, %v1241
    %v1292 = vpack.c.b16 %v1246, %v1244
    %v1293 = vpack.c.b16 %v1247, %v1245
    %v1294 = vpack.c.b16 %v1250, %v1248
    %v1295 = vpack.c.b16 %v1251, %v1249
    %v1296 = vpack.c.b16 %v1254, %v1252
    %v1297 = vpack.c.b16 %v1255, %v1253
    %v1298 = vpack.c.b16 %v1258, %v1256
    %v1299 = vpack.c.b16 %v1259, %v1257
    %v1300 = vpack.c.b16 %v1262, %v1260
    %v1301 = vpack.c.b16 %v1263, %v1261
    %v1302 = vpack.c.b16 %v1266, %v1264
    %v1303 = vpack.c.b16 %v1267, %v1265
    %v1304 = vpack.c.b16 %v1270, %v1268
    %v1305 = vpack.c.b16 %v1271, %v1269
    %v1306 = vpack.c.b16 %v1274, %v1272
    %v1307 = vpack.c.b16 %v1275, %v1273
    %1340 = vmatprep.subr.bf16.mxu0 %v1277
    %1341 = vmatpush1.bf16.msra.mxu0 %v1276
    %1342 = vmatprep.subr.bf16.mxu0 %v1279
    %1343 = vmatpush1.bf16.msra.mxu0 %v1278
    %1344 = vmatprep.subr.bf16.mxu0 %v1281
    %1345 = vmatpush1.bf16.msra.mxu0 %v1280
    %1346 = vmatprep.subr.bf16.mxu0 %v1283
    %1347 = vmatpush1.bf16.msra.mxu0 %v1282
    %1348 = vmatprep.subr.bf16.mxu0 %v1285
    %1349 = vmatpush1.bf16.msra.mxu0 %v1284
    %1350 = vmatprep.subr.bf16.mxu0 %v1287
    %1351 = vmatpush1.bf16.msra.mxu0 %v1286
    %1352 = vmatprep.subr.bf16.mxu0 %v1289
    %1353 = vmatpush1.bf16.msra.mxu0 %v1288
    %1354 = vmatprep.subr.bf16.mxu0 %v1291
    %1355 = vmatpush1.bf16.msra.mxu0 %v1290
    %1356 = vmatprep.subr.bf16.mxu0 %v1293
    %1357 = vmatpush1.bf16.msra.mxu0 %v1292
    %1358 = vmatprep.subr.bf16.mxu0 %v1295
    %1359 = vmatpush1.bf16.msra.mxu0 %v1294
    %1360 = vmatprep.subr.bf16.mxu0 %v1297
    %1361 = vmatpush1.bf16.msra.mxu0 %v1296
    %1362 = vmatprep.subr.bf16.mxu0 %v1299
    %1363 = vmatpush1.bf16.msra.mxu0 %v1298
    %1364 = vmatprep.subr.bf16.mxu0 %v1301
    %1365 = vmatpush1.bf16.msra.mxu0 %v1300
    %1366 = vmatprep.subr.bf16.mxu0 %v1303
    %1367 = vmatpush1.bf16.msra.mxu0 %v1302
    %1368 = vmatprep.subr.bf16.mxu0 %v1305
    %1369 = vmatpush1.bf16.msra.mxu0 %v1304
    %1370 = vmatprep.subr.bf16.mxu0 %v1307
    %1371 = vmatpush1.bf16.msra.mxu0 %v1306
    %1372 = vmatprep.mubr.bf16.mxu0 %v1136
    %1373 = vmatmul.mubr.bf16.gmra.mrb[0].mxu0 %v1135
    %v1374 = vpop.f32.mrb[0].mxu0
    %v1375 = vadd.f32 %v1173, %v1374
    %v1376 = vpop.f32.mrb[0].mxu0
    %v1377 = vadd.f32 %v1177, %v1376
    %v1378 = vpop.f32.mrb[0].mxu0
    %v1379 = vpop.f32.mrb[0].mxu0
    %1380 = vdwg.mxu0
    %vm1381 = vcmask 1041408
    %v1382 = vsel %vm1381, %v1375, 0.0
    %v1383 = vrot.slane %v1382, 4
    %v1384 = vadd.f32 %v1382, %v1383
    %v1385 = vrot.slane %v1384, 2
    %v1386 = vadd.f32 %v1384, %v1385
    %v1387 = vrot.slane %v1386, 1
    %v1388 = vadd.f32 %v1386, %v1387
    %v1389 = vsel %vm1381, %v1377, 0.0
    %v1390 = vrot.slane %v1389, 4
    %v1391 = vadd.f32 %v1389, %v1390
    %v1392 = vrot.slane %v1391, 2
    %v1393 = vadd.f32 %v1391, %v1392
    %v1394 = vrot.slane %v1393, 1
    %v1395 = vadd.f32 %v1393, %v1394
    %v1396 = vrcp.pop 2.0
    %v1397 = vmul.f32 %v1388, %v1396
    %v1398 = vmul.f32 %v1395, %v1396
    %v1399 = vsub.f32 %v1375, %v1397
    %v1400 = vsub.f32 %v1377, %v1398
    %v1401 = vmul.f32 %v1399, %v1399
    %v1402 = vmul.f32 %v1400, %v1400
    %v1403 = vsel %vm1381, %v1401, 0.0
    %v1404 = vrot.slane %v1403, 4
    %v1405 = vadd.f32 %v1403, %v1404
    %v1406 = vrot.slane %v1405, 2
    %v1407 = vadd.f32 %v1405, %v1406
    %v1408 = vrot.slane %v1407, 1
    %v1409 = vadd.f32 %v1407, %v1408
    %v1410 = vsel %vm1381, %v1402, 0.0
    %v1411 = vrot.slane %v1410, 4
    %v1412 = vadd.f32 %v1410, %v1411
    %v1413 = vrot.slane %v1412, 2
    %v1414 = vadd.f32 %v1412, %v1413
    %v1415 = vrot.slane %v1414, 1
    %v1416 = vadd.f32 %v1414, %v1415
    %v1417 = vmul.f32 %v1409, %v1396
    %v1418 = vmul.f32 %v1416, %v1396
    %v1419 = vadd.f32 %v1417, 1e-05
    %v1420 = vadd.f32 %v1418, 1e-05
    %v1421 = vrsqrt.pop %v1419
    %v1422 = vrsqrt.pop %v1420
    %v1423 = vmul.f32 %v1399, %v1421
    %v1424 = vmul.f32 %v1400, %v1422
    %v1426 = vlaneseq
    %v1427 = vshrl.u32 %v1426, 7
    %v1428 = vsub.s32 0, %v1427
    %v1429 = vrot.slane %v125, %v1428
    %v1430 = vlaneseq
    %v1431 = vshrl.u32 %v1430, 7
    %v1432 = vsub.s32 1, %v1431
    %v1433 = vrot.slane %v125, %v1432
    %v1436 = vmul.f32 %v1423, %v1429
    %v1437 = vmul.f32 %v1424, %v1433
    %v1439 = vlaneseq
    %v1440 = vshrl.u32 %v1439, 7
    %v1441 = vsub.s32 0, %v1440
    %v1442 = vrot.slane %v127, %v1441
    %v1443 = vlaneseq
    %v1444 = vshrl.u32 %v1443, 7
    %v1445 = vsub.s32 1, %v1444
    %v1446 = vrot.slane %v127, %v1445
    %v1449 = vadd.f32 %v1436, %v1442
    %v1450 = vadd.f32 %v1437, %v1446
    %v1451 = vmax.f32 %v1449, 0.0
    %v1452 = vmax.f32 %v1450, 0.0
    %v1453 = vpack.c.bf16 %v1452, %v1452
    %v1454 = vld [vmem:[#allocation8] sm:$0xf]
    %v1455 = vld [vmem:[#allocation8 + $0x4] sm:$0xf]
    %v1456 = vld [vmem:[#allocation8 + $0x8] sm:$0xf]
    %v1457 = vld [vmem:[#allocation8 + $0xc] sm:$0xf]
    %v1458 = vld [vmem:[#allocation8 + $0x10] sm:$0xf]
    %v1459 = vld [vmem:[#allocation8 + $0x14] sm:$0xf]
    %v1460 = vld [vmem:[#allocation8 + $0x18] sm:$0xf]
    %v1461 = vld [vmem:[#allocation8 + $0x1c] sm:$0xf]
    %v1462 = vld [vmem:[#allocation8 + $0x20] sm:$0xf]
    %v1463 = vld [vmem:[#allocation8 + $0x24] sm:$0xf]
    %v1464 = vld [vmem:[#allocation8 + $0x28] sm:$0xf]
    %v1465 = vld [vmem:[#allocation8 + $0x2c] sm:$0xf]
    %v1466 = vld [vmem:[#allocation8 + $0x30] sm:$0xf]
    %v1467 = vld [vmem:[#allocation8 + $0x34] sm:$0xf]
    %v1468 = vld [vmem:[#allocation8 + $0x38] sm:$0xf]
    %v1469 = vld [vmem:[#allocation8 + $0x3c] sm:$0xf]
    %v1486 = vunpack.c.l.b16 %v1454
    %v1487 = vunpack.c.l.b16 %v1455
    %v1488 = vunpack.c.l.b16 %v1456
    %v1489 = vunpack.c.l.b16 %v1457
    %v1490 = vunpack.c.l.b16 %v1458
    %v1491 = vunpack.c.l.b16 %v1459
    %v1492 = vunpack.c.l.b16 %v1460
    %v1493 = vunpack.c.l.b16 %v1461
    %v1494 = vunpack.c.l.b16 %v1462
    %v1495 = vunpack.c.l.b16 %v1463
    %v1496 = vunpack.c.l.b16 %v1464
    %v1497 = vunpack.c.l.b16 %v1465
    %v1498 = vunpack.c.l.b16 %v1466
    %v1499 = vunpack.c.l.b16 %v1467
    %v1500 = vunpack.c.l.b16 %v1468
    %v1501 = vunpack.c.l.b16 %v1469
    %v1502 = vpack.c.b16 %v1487, %v1486
    %v1503 = vpack.c.b16 %v1489, %v1488
    %v1504 = vpack.c.b16 %v1491, %v1490
    %v1505 = vpack.c.b16 %v1493, %v1492
    %v1506 = vpack.c.b16 %v1495, %v1494
    %v1507 = vpack.c.b16 %v1497, %v1496
    %v1508 = vpack.c.b16 %v1499, %v1498
    %v1509 = vpack.c.b16 %v1501, %v1500
    %1518 = vmatprep.subr.bf16.mxu0 0
    %1519 = vmatpush1.bf16.msra.mxu0 %v1502
    %1520 = vmatprep.subr.bf16.mxu0 0
    %1521 = vmatpush1.bf16.msra.mxu0 %v1503
    %1522 = vmatprep.subr.bf16.mxu0 0
    %1523 = vmatpush1.bf16.msra.mxu0 %v1504
    %1524 = vmatprep.subr.bf16.mxu0 0
    %1525 = vmatpush1.bf16.msra.mxu0 %v1505
    %1526 = vmatprep.subr.bf16.mxu0 0
    %1527 = vmatpush1.bf16.msra.mxu0 %v1506
    %1528 = vmatprep.subr.bf16.mxu0 0
    %1529 = vmatpush1.bf16.msra.mxu0 %v1507
    %1530 = vmatprep.subr.bf16.mxu0 0
    %1531 = vmatpush1.bf16.msra.mxu0 %v1508
    %1532 = vmatprep.subr.bf16.mxu0 0
    %1533 = vmatpush1.bf16.msra.mxu0 %v1509
    %1534 = vmatprep.subr.bf16.mxu0 0
    %1535 = vmatpush1.bf16.msra.mxu0 0
    %1536 = vmatprep.subr.bf16.mxu0 0
    %1537 = vmatpush1.bf16.msra.mxu0 0
    %1538 = vmatprep.subr.bf16.mxu0 0
    %1539 = vmatpush1.bf16.msra.mxu0 0
    %1540 = vmatprep.subr.bf16.mxu0 0
    %1541 = vmatpush1.bf16.msra.mxu0 0
    %1542 = vmatprep.subr.bf16.mxu0 0
    %1543 = vmatpush1.bf16.msra.mxu0 0
    %1544 = vmatprep.subr.bf16.mxu0 0
    %1545 = vmatpush1.bf16.msra.mxu0 0
    %1546 = vmatprep.subr.bf16.mxu0 0
    %1547 = vmatpush1.bf16.msra.mxu0 0
    %1548 = vmatprep.subr.bf16.mxu0 0
    %1549 = vmatpush1.bf16.msra.mxu0 0
    %1550 = vmatprep.mubr.bf16.mxu0 0
    %1551 = vmatmul.mubr.bf16.gmra.mrb[0].mxu0 %v1453
    %v1552 = vpop.f32.mrb[0].mxu0
    %v1553 = vadd.f32 %v128, %v1552
    %v1554 = vpop.f32.mrb[0].mxu0
    %v1555 = vpop.f32.mrb[0].mxu0
    %v1556 = vpop.f32.mrb[0].mxu0
    %1557 = vdwg.mxu0
    %v1558 = vsel %vm1381, %v1553, 0.0
    %v1559 = vrot.slane %v1558, 4
    %v1560 = vadd.f32 %v1558, %v1559
    %v1561 = vrot.slane %v1560, 2
    %v1562 = vadd.f32 %v1560, %v1561
    %v1563 = vrot.slane %v1562, 1
    %v1564 = vadd.f32 %v1562, %v1563
    %v1565 = vmul.f32 %v1564, %v1396
    %v1566 = vsub.f32 %v1553, %v1565
    %v1567 = vmul.f32 %v1566, %v1566
    %v1568 = vsel %vm1381, %v1567, 0.0
    %v1569 = vrot.slane %v1568, 4
    %v1570 = vadd.f32 %v1568, %v1569
    %v1571 = vrot.slane %v1570, 2
    %v1572 = vadd.f32 %v1570, %v1571
    %v1573 = vrot.slane %v1572, 1
    %v1574 = vadd.f32 %v1572, %v1573
    %v1575 = vmul.f32 %v1574, %v1396
    %v1576 = vadd.f32 %v1575, 1e-05
    %v1577 = vrsqrt.pop %v1576
    %v1578 = vmul.f32 %v1566, %v1577
    %v1579 = vmul.f32 %v1578, %v129
    %v1580 = vadd.f32 %v1579, %v130
    %v1581 = vmax.f32 %v1580, 0.0
    %v1582 = vpack.c.bf16 %v1581, %v1581
    %v1583 = vld [vmem:[#allocation10] sm:$0xf]
    %v1584 = vld [vmem:[#allocation10 + $0x4] sm:$0xf]
    %v1585 = vld [vmem:[#allocation10 + $0x8] sm:$0xf]
    %v1586 = vld [vmem:[#allocation10 + $0xc] sm:$0xf]
    %v1587 = vld [vmem:[#allocation10 + $0x10] sm:$0xf]
    %v1588 = vld [vmem:[#allocation10 + $0x14] sm:$0xf]
    %v1589 = vld [vmem:[#allocation10 + $0x18] sm:$0xf]
    %v1590 = vld [vmem:[#allocation10 + $0x1c] sm:$0xf]
    %v1591 = vld [vmem:[#allocation10 + $0x20] sm:$0xf]
    %v1592 = vld [vmem:[#allocation10 + $0x24] sm:$0xf]
    %v1593 = vld [vmem:[#allocation10 + $0x28] sm:$0xf]
    %v1594 = vld [vmem:[#allocation10 + $0x2c] sm:$0xf]
    %v1595 = vld [vmem:[#allocation10 + $0x30] sm:$0xf]
    %v1596 = vld [vmem:[#allocation10 + $0x34] sm:$0xf]
    %v1597 = vld [vmem:[#allocation10 + $0x38] sm:$0xf]
    %v1598 = vld [vmem:[#allocation10 + $0x3c] sm:$0xf]
    %v1615 = vunpack.c.l.b16 %v1583
    %v1616 = vunpack.c.l.b16 %v1584
    %v1617 = vunpack.c.l.b16 %v1585
    %v1618 = vunpack.c.l.b16 %v1586
    %v1619 = vunpack.c.l.b16 %v1587
    %v1620 = vunpack.c.l.b16 %v1588
    %v1621 = vunpack.c.l.b16 %v1589
    %v1622 = vunpack.c.l.b16 %v1590
    %v1623 = vunpack.c.l.b16 %v1591
    %v1624 = vunpack.c.l.b16 %v1592
    %v1625 = vunpack.c.l.b16 %v1593
    %v1626 = vunpack.c.l.b16 %v1594
    %v1627 = vunpack.c.l.b16 %v1595
    %v1628 = vunpack.c.l.b16 %v1596
    %v1629 = vunpack.c.l.b16 %v1597
    %v1630 = vunpack.c.l.b16 %v1598
    %v1631 = vpack.c.b16 %v1616, %v1615
    %v1632 = vpack.c.b16 %v1618, %v1617
    %v1633 = vpack.c.b16 %v1620, %v1619
    %v1634 = vpack.c.b16 %v1622, %v1621
    %v1635 = vpack.c.b16 %v1624, %v1623
    %v1636 = vpack.c.b16 %v1626, %v1625
    %v1637 = vpack.c.b16 %v1628, %v1627
    %v1638 = vpack.c.b16 %v1630, %v1629
    %1647 = vmatprep.subr.bf16.mxu0 0
    %1648 = vmatpush1.bf16.msra.mxu0 %v1631
    %1649 = vmatprep.subr.bf16.mxu0 0
    %1650 = vmatpush1.bf16.msra.mxu0 %v1632
    %1651 = vmatprep.subr.bf16.mxu0 0
    %1652 = vmatpush1.bf16.msra.mxu0 %v1633
    %1653 = vmatprep.subr.bf16.mxu0 0
    %1654 = vmatpush1.bf16.msra.mxu0 %v1634
    %1655 = vmatprep.subr.bf16.mxu0 0
    %1656 = vmatpush1.bf16.msra.mxu0 %v1635
    %1657 = vmatprep.subr.bf16.mxu0 0
    %1658 = vmatpush1.bf16.msra.mxu0 %v1636
    %1659 = vmatprep.subr.bf16.mxu0 0
    %1660 = vmatpush1.bf16.msra.mxu0 %v1637
    %1661 = vmatprep.subr.bf16.mxu0 0
    %1662 = vmatpush1.bf16.msra.mxu0 %v1638
    %1663 = vmatprep.subr.bf16.mxu0 0
    %1664 = vmatpush1.bf16.msra.mxu0 0
    %1665 = vmatprep.subr.bf16.mxu0 0
    %1666 = vmatpush1.bf16.msra.mxu0 0
    %1667 = vmatprep.subr.bf16.mxu0 0
    %1668 = vmatpush1.bf16.msra.mxu0 0
    %1669 = vmatprep.subr.bf16.mxu0 0
    %1670 = vmatpush1.bf16.msra.mxu0 0
    %1671 = vmatprep.subr.bf16.mxu0 0
    %1672 = vmatpush1.bf16.msra.mxu0 0
    %1673 = vmatprep.subr.bf16.mxu0 0
    %1674 = vmatpush1.bf16.msra.mxu0 0
    %1675 = vmatprep.subr.bf16.mxu0 0
    %1676 = vmatpush1.bf16.msra.mxu0 0
    %1677 = vmatprep.subr.bf16.mxu0 0
    %1678 = vmatpush1.bf16.msra.mxu0 0
    %1679 = vmatprep.mubr.bf16.mxu0 0
    %1680 = vmatmul.mubr.bf16.gmra.mrb[0].mxu0 %v1582
    %v1681 = vpop.f32.mrb[0].mxu0
    %v1682 = vadd.f32 %v131, %v1681
    %v1683 = vpop.f32.mrb[0].mxu0
    %v1684 = vpop.f32.mrb[0].mxu0
    %v1685 = vpop.f32.mrb[0].mxu0
    %1686 = vdwg.mxu0
    %v1687 = vpack.c.bf16 %v1451, %v1451
    %v1688 = vld [vmem:[#allocation11] sm:$0xf]
    %v1689 = vld [vmem:[#allocation11 + $0x4] sm:$0xf]
    %v1690 = vld [vmem:[#allocation11 + $0x8] sm:$0xf]
    %v1691 = vld [vmem:[#allocation11 + $0xc] sm:$0xf]
    %v1692 = vld [vmem:[#allocation11 + $0x10] sm:$0xf]
    %v1693 = vld [vmem:[#allocation11 + $0x14] sm:$0xf]
    %v1694 = vld [vmem:[#allocation11 + $0x18] sm:$0xf]
    %v1695 = vld [vmem:[#allocation11 + $0x1c] sm:$0xf]
    %v1696 = vld [vmem:[#allocation11 + $0x20] sm:$0xf]
    %v1697 = vld [vmem:[#allocation11 + $0x24] sm:$0xf]
    %v1698 = vld [vmem:[#allocation11 + $0x28] sm:$0xf]
    %v1699 = vld [vmem:[#allocation11 + $0x2c] sm:$0xf]
    %v1700 = vld [vmem:[#allocation11 + $0x30] sm:$0xf]
    %v1701 = vld [vmem:[#allocation11 + $0x34] sm:$0xf]
    %v1702 = vld [vmem:[#allocation11 + $0x38] sm:$0xf]
    %v1703 = vld [vmem:[#allocation11 + $0x3c] sm:$0xf]
    %v1720 = vunpack.c.l.b16 %v1688
    %v1721 = vunpack.c.l.b16 %v1689
    %v1722 = vunpack.c.l.b16 %v1690
    %v1723 = vunpack.c.l.b16 %v1691
    %v1724 = vunpack.c.l.b16 %v1692
    %v1725 = vunpack.c.l.b16 %v1693
    %v1726 = vunpack.c.l.b16 %v1694
    %v1727 = vunpack.c.l.b16 %v1695
    %v1728 = vunpack.c.l.b16 %v1696
    %v1729 = vunpack.c.l.b16 %v1697
    %v1730 = vunpack.c.l.b16 %v1698
    %v1731 = vunpack.c.l.b16 %v1699
    %v1732 = vunpack.c.l.b16 %v1700
    %v1733 = vunpack.c.l.b16 %v1701
    %v1734 = vunpack.c.l.b16 %v1702
    %v1735 = vunpack.c.l.b16 %v1703
    %v1736 = vpack.c.b16 %v1721, %v1720
    %v1737 = vpack.c.b16 %v1723, %v1722
    %v1738 = vpack.c.b16 %v1725, %v1724
    %v1739 = vpack.c.b16 %v1727, %v1726
    %v1740 = vpack.c.b16 %v1729, %v1728
    %v1741 = vpack.c.b16 %v1731, %v1730
    %v1742 = vpack.c.b16 %v1733, %v1732
    %v1743 = vpack.c.b16 %v1735, %v1734
    %1752 = vmatprep.subr.bf16.mxu0 0
    %1753 = vmatpush1.bf16.msra.mxu0 %v1736
    %1754 = vmatprep.subr.bf16.mxu0 0
    %1755 = vmatpush1.bf16.msra.mxu0 %v1737
    %1756 = vmatprep.subr.bf16.mxu0 0
    %1757 = vmatpush1.bf16.msra.mxu0 %v1738
    %1758 = vmatprep.subr.bf16.mxu0 0
    %1759 = vmatpush1.bf16.msra.mxu0 %v1739
    %1760 = vmatprep.subr.bf16.mxu0 0
    %1761 = vmatpush1.bf16.msra.mxu0 %v1740
    %1762 = vmatprep.subr.bf16.mxu0 0
    %1763 = vmatpush1.bf16.msra.mxu0 %v1741
    %1764 = vmatprep.subr.bf16.mxu0 0
    %1765 = vmatpush1.bf16.msra.mxu0 %v1742
    %1766 = vmatprep.subr.bf16.mxu0 0
    %1767 = vmatpush1.bf16.msra.mxu0 %v1743
    %1768 = vmatprep.subr.bf16.mxu0 0
    %1769 = vmatpush1.bf16.msra.mxu0 0
    %1770 = vmatprep.subr.bf16.mxu0 0
    %1771 = vmatpush1.bf16.msra.mxu0 0
    %1772 = vmatprep.subr.bf16.mxu0 0
    %1773 = vmatpush1.bf16.msra.mxu0 0
    %1774 = vmatprep.subr.bf16.mxu0 0
    %1775 = vmatpush1.bf16.msra.mxu0 0
    %1776 = vmatprep.subr.bf16.mxu0 0
    %1777 = vmatpush1.bf16.msra.mxu0 0
    %1778 = vmatprep.subr.bf16.mxu0 0
    %1779 = vmatpush1.bf16.msra.mxu0 0
    %1780 = vmatprep.subr.bf16.mxu0 0
    %1781 = vmatpush1.bf16.msra.mxu0 0
    %1782 = vmatprep.subr.bf16.mxu0 0
    %1783 = vmatpush1.bf16.msra.mxu0 0
    %1784 = vmatprep.mubr.bf16.mxu0 0
    %1785 = vmatmul.mubr.bf16.gmra.mrb[0].mxu0 %v1687
    %v1786 = vpop.f32.mrb[0].mxu0
    %v1787 = vadd.f32 %v132, %v1786
    %v1788 = vpop.f32.mrb[0].mxu0
    %v1789 = vpop.f32.mrb[0].mxu0
    %v1790 = vpop.f32.mrb[0].mxu0
    %1791 = vdwg.mxu0
    %v1792 = vlaneseq
    %v1793 = vand.u32 %v1792, 127
    %vm1794 = vcmp.lt.s32.totalorder %v1793, 10
    %vm1795 = vcmp.ge.s32.totalorder %v1793, 10
    %vm1796 = vcmp.lt.s32.totalorder %v1793, 12
    %vm1797 = vmand %vm1795, %vm1796
    %vm1798 = vcmp.eq.s32.totalorder %v1793, 12
    %v1799 = vsel %vm1794, 1, 0
    %vm1800 = vcmp.eq.s32.totalorder %v1799, 1
    %v1801 = vsel %vm1800, %v1682, -1e+30
    %v1802 = vsel %vm1381, %v1801, -inf
    %1803 = vmax.xlane.f32.xlu0 %v1802
    %v1804 = vpop.xlane.xlu0 %1803
    %v1805 = vsub.f32 %v1801, %v1804
    %v1806 = vmul.f32 %v1805, 1.442695
    %v1807 = vpow.pop %v1806
    %v1808 = vsel %vm1381, %v1807, 0.0
    %1809 = vadd.xlane.f32.xlu0 %v1808
    %v1810 = vpop.xlane.xlu0 %1809
    %v1811 = vlog2.pop %v1810
    %v1812 = vmul.f32 %v1811, 0.6931472
    %v1813 = vsub.f32 %v1682, %v1804
    %v1814 = vsub.f32 %v1813, %v1812
    %v1815 = vsel %vm1800, %v1814, 0.0
    %v1816 = vsel %vm1797, 1, 0
    %vm1817 = vcmp.eq.s32.totalorder %v1816, 1
    %v1818 = vsel %vm1817, %v1787, -1e+30
    %v1819 = vsel %vm1381, %v1818, -inf
    %1820 = vmax.xlane.f32.xlu0 %v1819
    %v1821 = vpop.xlane.xlu0 %1820
    %v1822 = vsub.f32 %v1818, %v1821
    %v1823 = vmul.f32 %v1822, 1.442695
    %v1824 = vpow.pop %v1823
    %v1825 = vsel %vm1381, %v1824, 0.0
    %1826 = vadd.xlane.f32.xlu0 %v1825
    %v1827 = vpop.xlane.xlu0 %1826
    %v1828 = vlog2.pop %v1827
    %v1829 = vmul.f32 %v1828, 0.6931472
    %v1830 = vsub.f32 %v1787, %v1821
    %v1831 = vsub.f32 %v1830, %v1829
    %v1832 = vsel %vm1817, %v1831, 0.0
    %v1833 = vmul.f32 %v1451, %v1451
    %v1834 = vsel %vm1381, %v1833, 0.0
    %v1835 = vrot.slane %v1834, 4
    %v1836 = vadd.f32 %v1834, %v1835
    %v1837 = vrot.slane %v1836, 2
    %v1838 = vadd.f32 %v1836, %v1837
    %v1839 = vrot.slane %v1838, 1
    %v1840 = vadd.f32 %v1838, %v1839
    %v1841 = vmul.f32 %v1840, 0.5
    %vm1842 = vcmp.lt.s32.totalorder %v1793, 100
    %v1843 = vsub.f32 %v1841, 1.0
    %v1844 = vmul.f32 %v1843, %v1843
    %v1845 = vsel %vm1842, %v1844, 0.0
    %1846 = vadd.xlane.f32.xlu0 %v1845
    %v1847 = vpop.xlane.xlu0 %1846
    %1848 = vmatprep.subr.mxu0 0.0
    %1849 = vmatpush1.xpose.msra.mxu0 %v1451
    %1850 = vmatprep.subr.mxu0 0.0
    %1851 = vmatpush1.xpose.msra.mxu0 0.0
    %1852 = vmatprep.subr.mxu0 0.0
    %1853 = vmatpush1.xpose.msra.mxu0 0.0
    %1854 = vmatprep.subr.mxu0 0.0
    %1855 = vmatpush1.xpose.msra.mxu0 0.0
    %1856 = vmatprep.subr.mxu0 0.0
    %1857 = vmatpush1.xpose.msra.mxu0 0.0
    %1858 = vmatprep.subr.mxu0 0.0
    %1859 = vmatpush1.xpose.msra.mxu0 0.0
    %1860 = vmatprep.subr.mxu0 0.0
    %1861 = vmatpush1.xpose.msra.mxu0 0.0
    %1862 = vmatprep.subr.mxu0 0.0
    %1863 = vmatpush1.xpose.msra.mxu0 0.0
    %1864 = vmatprep.subr.mxu0 0.0
    %1865 = vmatpush1.xpose.msra.mxu0 0.0
    %1866 = vmatprep.subr.mxu0 0.0
    %1867 = vmatpush1.xpose.msra.mxu0 0.0
    %1868 = vmatprep.subr.mxu0 0.0
    %1869 = vmatpush1.xpose.msra.mxu0 0.0
    %1870 = vmatprep.subr.mxu0 0.0
    %1871 = vmatpush1.xpose.msra.mxu0 0.0
    %1872 = vmatprep.subr.mxu0 0.0
    %1873 = vmatpush1.xpose.msra.mxu0 0.0
    %1874 = vmatprep.subr.mxu0 0.0
    %1875 = vmatpush1.xpose.msra.mxu0 0.0
    %1876 = vmatprep.subr.mxu0 0.0
    %1877 = vmatpush1.xpose.msra.mxu0 0.0
    %1878 = vmatprep.subr.mxu0 0.0
    %1879 = vmatpush1.xpose.msra.mxu0 0.0
    %1880 = vmatprep.subr.mxu0 0.0
    %1881 = vmatpush1.xpose.msra.mxu0 0.0
    %1882 = vmatprep.subr.mxu0 0.0
    %1883 = vmatpush1.xpose.msra.mxu0 0.0
    %1884 = vmatprep.subr.mxu0 0.0
    %1885 = vmatpush1.xpose.msra.mxu0 0.0
    %1886 = vmatprep.subr.mxu0 0.0
    %1887 = vmatpush1.xpose.msra.mxu0 0.0
    %1888 = vmatprep.subr.mxu0 0.0
    %1889 = vmatpush1.xpose.msra.mxu0 0.0
    %1890 = vmatprep.subr.mxu0 0.0
    %1891 = vmatpush1.xpose.msra.mxu0 0.0
    %1892 = vmatprep.subr.mxu0 0.0
    %1893 = vmatpush1.xpose.msra.mxu0 0.0
    %1894 = vmatprep.subr.mxu0 0.0
    %1895 = vmatpush1.xpose.msra.mxu0 0.0
    %1896 = vmatprep.subr.mxu0 0.0
    %1897 = vmatpush1.xpose.msra.mxu0 0.0
    %1898 = vmatprep.subr.mxu0 0.0
    %1899 = vmatpush1.xpose.msra.mxu0 0.0
    %1900 = vmatprep.subr.mxu0 0.0
    %1901 = vmatpush1.xpose.msra.mxu0 0.0
    %1902 = vmatprep.subr.mxu0 0.0
    %1903 = vmatpush1.xpose.msra.mxu0 0.0
    %1904 = vmatprep.subr.mxu0 0.0
    %1905 = vmatpush1.xpose.msra.mxu0 0.0
    %1906 = vmatprep.subr.mxu0 0.0
    %1907 = vmatpush1.xpose.msra.mxu0 0.0
    %1908 = vmatprep.subr.mxu0 0.0
    %1909 = vmatpush1.xpose.msra.mxu0 0.0
    %1910 = vmatprep.subr.mxu0 0.0
    %1911 = vmatpush1.xpose.msra.mxu0 0.0
    %1912 = vmatprep.mubr.f32.mxu0 0.0
    %1913 = vmatmul.mubr.f32.gmra.mrb[0].mxu0 %v1451
    %v1914 = vpop.f32.mrb[0].mxu0
    %v1915 = vadd.f32 0.0, %v1914
    %v1916 = vpop.f32.mrb[0].mxu0
    %1917 = vdwg.mxu0
    %v1918 = vmul.f32 %v1915, %v1915
    %vm1919 = vcmask 9216
    %v1920 = vsel %vm1919, %v1918, 0.0
    %1921 = vadd.xlane.f32.xlu0 %v1920
    %v1922 = vpop.xlane.xlu0 %1921
    %v1923 = vrot.slane %v1922, 4
    %v1924 = vadd.f32 %v1922, %v1923
    %v1925 = vrot.slane %v1924, 2
    %v1926 = vadd.f32 %v1924, %v1925
    %v1927 = vrot.slane %v1926, 1
    %v1928 = vadd.f32 %v1926, %v1927
    %s1929 = vtos %v1928
    %v1930 = vstv %s1929
    %v1931 = vmul.f32 %v1930, 0.25
    %v1932 = vmul.f32 %v1841, %v1841
    %vm1933 = vcmask 1040384
    %v1934 = vsel %vm1933, %v1932, 0.0
    %1935 = vadd.xlane.f32.xlu0 %v1934
    %v1936 = vpop.xlane.xlu0 %1935
    %v1937 = vrot.slane %v1936, 4
    %v1938 = vadd.f32 %v1936, %v1937
    %v1939 = vrot.slane %v1938, 2
    %v1940 = vadd.f32 %v1938, %v1939
    %v1941 = vrot.slane %v1940, 1
    %v1942 = vadd.f32 %v1940, %v1941
    %s1943 = vtos %v1942
    %v1944 = vstv %s1943
    %v1945 = vsub.f32 %v1931, %v1944
    %v1946 = vmul.f32 %v1945, 0.005
    %v1947 = vadd.f32 %v1847, %v1946
    %v1948 = vsel %vm1798, 1, 0
    %vm1949 = vcmp.eq.s32.totalorder %v1948, 1
    %v1950 = vsel %vm1949, %v1947, 0.0
    %v1951 = vadd.f32 %v1815, %v1832
    %v1952 = vadd.f32 %v1951, %v1950
    %1953 = vst [vmem:[#allocation14] sm:$0x3] %v1952
    // Predicated region
    $region58: #{tpu_custom_call.1} parent=1 // pred_check
      _
    $region59: #{tpu_custom_call.1} parent=1 // pred_check_branch
      %1955 = sbr.rel (0) target = $region61
    $region60: #{tpu_custom_call.1} parent=1 // pred_region
      %s1957 = ssub.s32 32, 32
      %1958 = vsyncadd [#allocation4], %s1957
      %s1960 = sshll.u32 [#allocation14], 4
      %s1961 = int_to_ptr.vmem [resolvable:$true] %s1960
      %1963 = dma.vmem_to_hbm [thread:$0]  %s1961, 32, %s7, [#allocation4]
    $region61: #{tpu_custom_call.1} parent=1 // pred_fallthru
      _
    // Predicated region
    $region62: #{tpu_custom_call.1} parent=1 // pred_check
      _
    $region63: #{tpu_custom_call.1} parent=1 // pred_check_branch
      %1965 = sbr.rel (0) target = $region65
    $region64: #{tpu_custom_call.1} parent=1 // pred_region
      %1966 = dma.done [#allocation4], 32
    $region65: #{tpu_custom_call.1} parent=1 // pred_fallthru
      _
    %1967 = vsyncpa [#allocation3], 1
    %1968 = vsyncpa [#allocation6], 1
    %1969 = vsyncpa [#allocation9], 1
    %1970 = vsyncpa [#allocation12], 1
    %1971 = vsyncpa [#allocation4], 1

</llo_original>
